<compile_context>
chip_gen: v5e
topology: v5e:2x2
jax: 0.10.0
libtpu: 0.0.40
codegen_flags: <defaults>
</compile_context>

<pallas_src>
import numpy as np
import jax
import jax.numpy as jnp
from jax.experimental import pallas as pl
from jax.experimental.pallas import tpu as pltpu

# ----- model hyper-parameters (small, consistent with the module signature) -----
HID_DIM = 32                  # hid_dim (= n_embd)
N_ATTN = 32                   # n_attn
N_HEAD = 4                    # n_head
CTX_LEN = 8                   # ctx_len (sequence length T); power of two
N_FFN = 32                    # n_ffn
HIDDEN_SZ = 5 * N_FFN // 2    # ChannelMix hidden size
HEAD_SIZE = N_ATTN // N_HEAD
LN_EPS = 1e-5

# bf16 weight slab halves DMA bytes and is the native MXU input; kept float32
# here so the strict 1e-4 self-check against the f32 reference passes.
# (Only the projection weights/activations feeding the MXU are cast; k, sum_k,
#  the tril cumsum and the reciprocals always stay f32.)
MATMUL_DTYPE = jnp.float32

# ---------------- packed-slab layout (shared by packer and kernel) ----------------
SLAB_LANES = 128
# param slab (float32): rows
_R_LN1G, _R_LN1B, _R_LN2G, _R_LN2B = 0, 1, 2, 3
_R_KB, _R_VB, _R_RB, _R_OB = 4, 5, 6, 7
_R_MKB, _R_MVB, _R_MWB, _R_MRB = 8, 9, 10, 11
_R_TG = 16                                   # rows 16:16+T,  lane 0        (time_gamma)
_R_TRI = 24                                  # rows 24:24+T,  lanes 0:T     (causal tril)
_R_W = 32                                    # rows 32+h*T.., lanes 0:T     (per-head decay)
P_SLAB_ROWS = _R_W + N_HEAD * CTX_LEN        # 64
# weight slab (MATMUL_DTYPE): rows (all multiples of 8)
_W_KW, _W_VW, _W_RW, _W_OW = 0, HID_DIM, 2 * HID_DIM, 3 * HID_DIM
_W_MKW = 4 * HID_DIM
_W_MVW = _W_MKW + HID_DIM
_W_MWW = _W_MVW + HID_DIM
_W_MRW = _W_MWW + HIDDEN_SZ
W_SLAB_ROWS = _W_MRW + HID_DIM               # 304


# --------------------------------------------------------------------------
# Pallas kernel: one grid step processes TB = rows//T full sequences.
# --------------------------------------------------------------------------
def rwkv_kernel(x_ref, ps_ref, ws_ref, o_ref):
    x = x_ref[...]                           # (rows, C) float32, batch fused into rows
    rows, C = x.shape
    T = CTX_LEN
    TB = rows // T                           # sequences fused into this block (static)

    # ---- hoisted masks (built once, reused by both time_shift calls + heads) ----
    row_idx = jax.lax.broadcasted_iota(jnp.int32, (rows, 1), 0)
    seq_start = (row_idx & (T - 1)) == 0     # T is a power of two
    col_idx = jax.lax.broadcasted_iota(jnp.int32, (rows, C), 1)
    low_half = col_idx < (C // 2)            # channels that get time-shifted
    lane = jax.lax.broadcasted_iota(jnp.int32, (1, N_ATTN), 1)
    head_masks = [((lane >= h * HEAD_SIZE) & (lane < (h + 1) * HEAD_SIZE)
                   ).astype(jnp.float32) for h in range(N_HEAD)]

    # ---- grid-invariant params: static slices of the packed slabs ----
    ln1_g = ps_ref[_R_LN1G:_R_LN1G + 1, 0:C]
    ln1_b = ps_ref[_R_LN1B:_R_LN1B + 1, 0:C]
    ln2_g = ps_ref[_R_LN2G:_R_LN2G + 1, 0:C]
    ln2_b = ps_ref[_R_LN2B:_R_LN2B + 1, 0:C]
    tri = ps_ref[_R_TRI:_R_TRI + T, 0:T]                          # (T,T) inclusive cumsum
    w_heads = [ps_ref[_R_W + h * T:_R_W + (h + 1) * T, 0:T]       # (T,T) per-head decay
               for h in range(N_HEAD)]
    tg_t = ps_ref[_R_TG:_R_TG + T, 0:1]                           # (T,1) time_gamma
    tg_col = tg_t if TB == 1 else jnp.concatenate([tg_t] * TB, axis=0)   # (rows,1)

    def layernorm(h, g, b):
        mu = jnp.mean(h, axis=-1, keepdims=True)
        var = jnp.mean((h - mu) ** 2, axis=-1, keepdims=True)
        return (h - mu) * jax.lax.rsqrt(var + LN_EPS) * g + b

    def time_shift(h):
        # nn.ZeroPad2d((0,0,1,-1)) on the first C//2 channels: shift rows down by
        # one within each length-T sequence; pltpu.roll runs on the XLU.
        rolled = pltpu.roll(h, 1, 0)
        shifted = jnp.where(seq_start, 0.0, rolled)
        return jnp.where(low_half, shifted, h)

    def linear(h, w_off, n_in, n_out, b_row):
        # weights loaded at the point of use (keeps vreg pressure low); bias in f32.
        w = ws_ref[w_off:w_off + n_in, 0:n_out]
        b = ps_ref[b_row:b_row + 1, 0:n_out]
        return jnp.dot(h.astype(w.dtype), w, preferred_element_type=jnp.float32) + b

    # ---------------- RWKV_TimeMix (attention branch) ----------------
    xn = layernorm(x, ln1_g, ln1_b)
    xs = time_shift(xn)
    k = linear(xs, _W_KW, HID_DIM, N_ATTN, _R_KB)
    v = linear(xs, _W_VW, HID_DIM, N_ATTN, _R_VB)
    r = linear(xs, _W_RW, HID_DIM, N_ATTN, _R_RB)

    k = jnp.exp(jnp.clip(k, -60.0, 30.0))    # stays f32 (reaches ~1e13)
    kv = k * v
    sig_r = jax.nn.sigmoid(r)

    # Per-sequence causal cumsum + per-head decay mix:
    #   one (T,T)x(T,n_attn) matmul for sum_k and one full-width matmul per head,
    #   combined with hoisted 0/1 lane masks (no lane-axis concatenate, no kron'd
    #   zero blocks, no wasted MXU FLOPs).
    chunks = []
    for b in range(TB):                      # static unroll over fused sequences
        sl = slice(b * T, (b + 1) * T)       # sublane-aligned (T = 8)
        k_b, kv_b, sr_b = k[sl], kv[sl], sig_r[sl]
        sum_k_b = jnp.dot(tri, k_b, preferred_element_type=jnp.float32)
        wkv_b = head_masks[0] * jnp.dot(w_heads[0], kv_b,
                                        preferred_element_type=jnp.float32)
        for h in range(1, N_HEAD):
            wkv_b = wkv_b + head_masks[h] * jnp.dot(
                w_heads[h], kv_b, preferred_element_type=jnp.float32)
        # exact reciprocal (holds the 1e-4 self-check); approx=True + one Newton
        # step moves it onto the otherwise-idle EUP slot if tolerance allows.
        chunks.append(sr_b * wkv_b * pl.reciprocal(sum_k_b, approx=False))
    rwkv = chunks[0] if TB == 1 else jnp.concatenate(chunks, axis=0)

    x1 = x + linear(rwkv, _W_OW, N_ATTN, HID_DIM, _R_OB) * tg_col

    # ---------------- RWKV_ChannelMix (ffn branch) ----------------
    yn = layernorm(x1, ln2_g, ln2_b)
    ys = time_shift(yn)
    mk = linear(ys, _W_MKW, HID_DIM, HIDDEN_SZ, _R_MKB)
    mv = linear(ys, _W_MVW, HID_DIM, HIDDEN_SZ, _R_MVB)
    # mish(x) = x*tanh(softplus(x)) = x*(t^2+2t)/(t^2+2t+2) with t=e^x
    # -> 1 exp + 1 reciprocal on the EUP instead of exp+log1p+tanh.
    t = jnp.exp(jnp.minimum(mk, 20.0))       # min() keeps t^2 finite; exact for f32
    u = t * (t + 2.0)
    mish_k = mk * u * pl.reciprocal(u + 2.0, approx=False)
    wkv2 = linear(mish_k * mv, _W_MWW, HIDDEN_SZ, HID_DIM, _R_MWB)
    rwkv2 = jax.nn.sigmoid(linear(ys, _W_MRW, HID_DIM, HID_DIM, _R_MRB)) * wkv2
    o_ref[...] = x1 + rwkv2


# --------------------------------------------------------------------------
# Wrapper: batch fused into rows; batch_tile tuned per TPU generation.
# --------------------------------------------------------------------------
def _pick_batch_tile(B, T):
    kind = ""
    try:
        kind = (jax.devices()[0].device_kind or "").lower()
    except Exception:
        pass
    # ~256 fused rows fills the v6e/v7x MXU height; ~128 for v5e's 128x128 MXU.
    rows_target = 128 if "v5" in kind else 256
    bt = max(1, min(B, max(1, rows_target // T)))
    while B % bt != 0:
        bt -= 1
    if "v7" in kind and B >= 2:
        # v7x has 2 TensorCores/chip: make sure the parallel grid has >=2 steps.
        while bt > 1 and (B // bt) < 2:
            bt -= 1
            while B % bt != 0:
                bt -= 1
    return bt


def rwkv_forward(x, params, batch_tile=None):
    B, T, C = x.shape
    assert T == CTX_LEN and C == HID_DIM
    if batch_tile is None:
        batch_tile = _pick_batch_tile(B, T)
    assert B % batch_tile == 0
    rows = batch_tile * T                                    # rows per grid step

    pslab, wslab = make_kernel_operands(params)
    x2 = x.reshape(B * T, C)                                 # free reshape outside the kernel

    wbytes = jnp.dtype(MATMUL_DTYPE).itemsize
    flops = (2 * B * T * (3 * C * N_ATTN + N_ATTN * C + 2 * C * HIDDEN_SZ
                          + HIDDEN_SZ * C + C * C)
             + 2 * B * (1 + N_HEAD) * T * T * N_ATTN)
    transcendentals = B * T * (2 * N_ATTN + 2 * HIDDEN_SZ + C + N_ATTN)
    bytes_accessed = (2 * B * T * C * 4
                      + P_SLAB_ROWS * SLAB_LANES * 4
                      + W_SLAB_ROWS * SLAB_LANES * wbytes)

    out = pl.pallas_call(
        rwkv_kernel,
        out_shape=jax.ShapeDtypeStruct((B * T, C), jnp.float32),
        grid=(B // batch_tile,),
        in_specs=[
            pl.BlockSpec((rows, C), lambda i: (i, 0)),
            pl.BlockSpec((P_SLAB_ROWS, SLAB_LANES), lambda i: (0, 0)),   # grid-invariant
            pl.BlockSpec((W_SLAB_ROWS, SLAB_LANES), lambda i: (0, 0)),   # grid-invariant
        ],
        out_specs=pl.BlockSpec((rows, C), lambda i: (i, 0)),
        compiler_params=pltpu.CompilerParams(
            dimension_semantics=("parallel",),
            vmem_limit_bytes=16 * 1024 * 1024),
        cost_estimate=pl.CostEstimate(flops=int(flops),
                                      transcendentals=int(transcendentals),
                                      bytes_accessed=int(bytes_accessed)),
    )(x2, pslab, wslab)
    return out.reshape(B, T, C)


# --------------------------------------------------------------------------
# Parameter construction (deterministic, mirrors the PyTorch __init__ shapes).
# --------------------------------------------------------------------------
def build_time_w(n_head, ctx_len):
    curve = np.array([-(ctx_len - 1 - i) for i in range(ctx_len)], dtype=np.float32)
    ww = np.ones((n_head, ctx_len), dtype=np.float32)
    for h in range(n_head):
        if h < n_head - 1:
            decay = float(ctx_len) ** (-(h + 1) / (n_head - 1))
        else:
            decay = 0.0
        ww[h] = np.exp(curve * decay)
    return jnp.asarray(ww)


def build_w_matrix(time_w, time_alpha, time_beta, T):
    # exact replication of the pad/tile/reshape circulant trick from RWKV_TimeMix
    H, TT = time_w.shape
    w = jnp.pad(time_w, ((0, 0), (0, TT)))
    w = jnp.tile(w, (1, TT))
    w = w[:, :-TT].reshape(H, TT, 2 * TT - 1)
    w = w[:, :, TT - 1:]
    return w[:, :T, :T] * time_alpha[:, :, :T] * time_beta[:, :T, :]


def init_linear(key, fan_in, fan_out):
    bound = 1.0 / float(np.sqrt(fan_in))
    kw, kb = jax.random.split(key)
    w = jax.random.uniform(kw, (fan_in, fan_out), jnp.float32, -bound, bound)
    b = jax.random.uniform(kb, (1, fan_out), jnp.float32, -bound, bound)
    return w, b


def make_params(key):
    keys = jax.random.split(key, 8)
    p = {}
    p["ln1_g"] = jnp.ones((1, HID_DIM), jnp.float32)
    p["ln1_b"] = jnp.zeros((1, HID_DIM), jnp.float32)
    p["ln2_g"] = jnp.ones((1, HID_DIM), jnp.float32)
    p["ln2_b"] = jnp.zeros((1, HID_DIM), jnp.float32)
    time_w = build_time_w(N_HEAD, CTX_LEN)
    time_alpha = jnp.ones((N_HEAD, 1, CTX_LEN), jnp.float32)
    time_beta = jnp.ones((N_HEAD, CTX_LEN, 1), jnp.float32)
    p["w_mat"] = build_w_matrix(time_w, time_alpha, time_beta, CTX_LEN)   # (H,T,T)
    p["tg"] = jnp.ones((CTX_LEN, 1), jnp.float32)                         # time_gamma
    p["kw"], p["kb"] = init_linear(keys[0], HID_DIM, N_ATTN)
    p["vw"], p["vb"] = init_linear(keys[1], HID_DIM, N_ATTN)
    p["rw"], p["rb"] = init_linear(keys[2], HID_DIM, N_ATTN)
    p["ow"], p["ob"] = init_linear(keys[3], N_ATTN, HID_DIM)
    p["mkw"], p["mkb"] = init_linear(keys[4], HID_DIM, HIDDEN_SZ)
    p["mvw"], p["mvb"] = init_linear(keys[5], HID_DIM, HIDDEN_SZ)
    p["mww"], p["mwb"] = init_linear(keys[6], HIDDEN_SZ, HID_DIM)
    p["mrw"], p["mrb"] = init_linear(keys[7], HID_DIM, HID_DIM)
    return p


def make_kernel_operands(p):
    """Pack the ~24 tiny parameters into two lane-dense slabs (2 DMAs total)."""
    T = CTX_LEN
    ps = jnp.zeros((P_SLAB_ROWS, SLAB_LANES), jnp.float32)

    def put_row(a, row, vec):
        v = vec.reshape(-1)
        return a.at[row, :v.shape[0]].set(v)

    ps = put_row(ps, _R_LN1G, p["ln1_g"]); ps = put_row(ps, _R_LN1B, p["ln1_b"])
    ps = put_row(ps, _R_LN2G, p["ln2_g"]); ps = put_row(ps, _R_LN2B, p["ln2_b"])
    ps = put_row(ps, _R_KB, p["kb"]);      ps = put_row(ps, _R_VB, p["vb"])
    ps = put_row(ps, _R_RB, p["rb"]);      ps = put_row(ps, _R_OB, p["ob"])
    ps = put_row(ps, _R_MKB, p["mkb"]);    ps = put_row(ps, _R_MVB, p["mvb"])
    ps = put_row(ps, _R_MWB, p["mwb"]);    ps = put_row(ps, _R_MRB, p["mrb"])
    ps = ps.at[_R_TG:_R_TG + T, 0].set(p["tg"][:, 0])
    ps = ps.at[_R_TRI:_R_TRI + T, 0:T].set(jnp.tril(jnp.ones((T, T), jnp.float32)))
    for h in range(N_HEAD):
        ps = ps.at[_R_W + h * T:_R_W + (h + 1) * T, 0:T].set(p["w_mat"][h])

    ws = jnp.zeros((W_SLAB_ROWS, SLAB_LANES), jnp.float32)

    def put_mat(a, row, m):
        return a.at[row:row + m.shape[0], 0:m.shape[1]].set(m)

    ws = put_mat(ws, _W_KW, p["kw"]);   ws = put_mat(ws, _W_VW, p["vw"])
    ws = put_mat(ws, _W_RW, p["rw"]);   ws = put_mat(ws, _W_OW, p["ow"])
    ws = put_mat(ws, _W_MKW, p["mkw"]); ws = put_mat(ws, _W_MVW, p["mvw"])
    ws = put_mat(ws, _W_MWW, p["mww"]); ws = put_mat(ws, _W_MRW, p["mrw"])
    return ps, ws.astype(MATMUL_DTYPE)


# --------------------------------------------------------------------------
# Pure-JAX reference (same math) for a correctness check.
# --------------------------------------------------------------------------
def rwkv_reference(x, p):
    def layernorm(h, g, b):
        mu = jnp.mean(h, axis=-1, keepdims=True)
        var = jnp.mean((h - mu) ** 2, axis=-1, keepdims=True)
        return (h - mu) / jnp.sqrt(var + LN_EPS) * g + b

    def time_shift(h):
        C = h.shape[-1]
        first = h[:, :, :C // 2]
        first = jnp.concatenate([jnp.zeros_like(first[:, :1]), first[:, :-1]], axis=1)
        return jnp.concatenate([first, h[:, :, C // 2:]], axis=-1)

    B, T, _ = x.shape
    xn = layernorm(x, p["ln1_g"], p["ln1_b"])
    xs = time_shift(xn)
    k = xs @ p["kw"] + p["kb"]
    v = xs @ p["vw"] + p["vb"]
    r = xs @ p["rw"] + p["rb"]
    k = jnp.exp(jnp.clip(k, -60.0, 30.0))
    sum_k = jnp.cumsum(k, axis=1)
    kv = (k * v).reshape(B, T, N_HEAD, HEAD_SIZE)
    wkv = jnp.einsum("htu,buhc->bthc", p["w_mat"], kv).reshape(B, T, -1)
    rwkv = jax.nn.sigmoid(r) * wkv / sum_k
    attn = (rwkv @ p["ow"] + p["ob"]) * p["tg"]
    x1 = x + attn

    yn = layernorm(x1, p["ln2_g"], p["ln2_b"])
    ys = time_shift(yn)
    mk = ys @ p["mkw"] + p["mkb"]
    mv = ys @ p["mvw"] + p["mvb"]
    mish = mk * jnp.tanh(jax.nn.softplus(mk))
    wkv2 = (mish * mv) @ p["mww"] + p["mwb"]
    rwkv2 = jax.nn.sigmoid(ys @ p["mrw"] + p["mrb"]) * wkv2
    return x1 + rwkv2


if __name__ == "__main__":
    key = jax.random.PRNGKey(0)
    kx, kp = jax.random.split(key)
    B = 2
    x = jax.random.normal(kx, (B, CTX_LEN, HID_DIM), jnp.float32)

    params = make_params(kp)

    out = jax.block_until_ready(rwkv_forward(x, params))

    ref = rwkv_reference(x, params)
    tol = 1e-4 if MATMUL_DTYPE == jnp.float32 else 2e-2
    np.testing.assert_allclose(np.asarray(out), np.asarray(ref), rtol=tol, atol=tol)
    assert np.all(np.isfinite(np.asarray(out)))
    print("KERNEL_OK")
</pallas_src>

<mosaic_0001>
module attributes {stable_mosaic.version = 11 : i64} {
  func.func @rwkv_kernel(%arg0: i32, %arg1: memref<16x32xf32, #tpu.memory_space<vmem>>, %arg2: memref<64x128xf32, #tpu.memory_space<vmem>>, %arg3: memref<304x128xf32, #tpu.memory_space<vmem>>, %arg4: memref<16x32xf32, #tpu.memory_space<vmem>>) attributes {dimension_semantics = [#tpu.dimension_semantics<parallel>], iteration_bounds = array<i64: 1>, scalar_prefetch = 0 : i64, scratch_operands = 0 : i64, tpu.core_type = #tpu.core_type<tc>, window_params = [{transform_indices = @transform_0, window_bounds = array<i64: 16, 32>}, {pipeline_mode = #tpu.pipeline_mode<synchronous>, transform_indices = @transform_1, window_bounds = array<i64: 64, 128>}, {pipeline_mode = #tpu.pipeline_mode<synchronous>, transform_indices = @transform_2, window_bounds = array<i64: 304, 128>}, {transform_indices = @transform_3, window_bounds = array<i64: 16, 32>}]} {
    %c0 = arith.constant 0 : index
    %c0_0 = arith.constant 0 : index
    %0 = vector.load %arg1[%c0, %c0_0] : memref<16x32xf32, #tpu.memory_space<vmem>>, vector<16x32xf32>
    %1 = tpu.iota {dimensions = array<i32: 0>} : vector<16x1xi32>
    %c7_i32 = arith.constant 7 : i32
    %2 = vector.broadcast %c7_i32 : i32 to vector<16x1xi32>
    %3 = arith.andi %1, %2 : vector<16x1xi32>
    %c0_i32 = arith.constant 0 : i32
    %4 = vector.broadcast %c0_i32 : i32 to vector<16x1xi32>
    %5 = arith.cmpi eq, %3, %4 : vector<16x1xi32>
    %6 = tpu.iota {dimensions = array<i32: 1>} : vector<16x32xi32>
    %c16_i32 = arith.constant 16 : i32
    %7 = vector.broadcast %c16_i32 : i32 to vector<16x32xi32>
    %8 = arith.cmpi slt, %6, %7 : vector<16x32xi32>
    %9 = tpu.iota {dimensions = array<i32: 1>} : vector<1x32xi32>
    %c0_i32_1 = arith.constant 0 : i32
    %10 = vector.broadcast %c0_i32_1 : i32 to vector<1x32xi32>
    %11 = arith.cmpi sge, %9, %10 : vector<1x32xi32>
    %c8_i32 = arith.constant 8 : i32
    %12 = vector.broadcast %c8_i32 : i32 to vector<1x32xi32>
    %13 = arith.cmpi slt, %9, %12 : vector<1x32xi32>
    %14 = arith.andi %11, %13 : vector<1x32xi1>
    %15 = arith.extui %14 : vector<1x32xi1> to vector<1x32xi32>
    %16 = arith.sitofp %15 : vector<1x32xi32> to vector<1x32xf32>
    %c8_i32_2 = arith.constant 8 : i32
    %17 = vector.broadcast %c8_i32_2 : i32 to vector<1x32xi32>
    %18 = arith.cmpi sge, %9, %17 : vector<1x32xi32>
    %c16_i32_3 = arith.constant 16 : i32
    %19 = vector.broadcast %c16_i32_3 : i32 to vector<1x32xi32>
    %20 = arith.cmpi slt, %9, %19 : vector<1x32xi32>
    %21 = arith.andi %18, %20 : vector<1x32xi1>
    %22 = arith.extui %21 : vector<1x32xi1> to vector<1x32xi32>
    %23 = arith.sitofp %22 : vector<1x32xi32> to vector<1x32xf32>
    %c16_i32_4 = arith.constant 16 : i32
    %24 = vector.broadcast %c16_i32_4 : i32 to vector<1x32xi32>
    %25 = arith.cmpi sge, %9, %24 : vector<1x32xi32>
    %c24_i32 = arith.constant 24 : i32
    %26 = vector.broadcast %c24_i32 : i32 to vector<1x32xi32>
    %27 = arith.cmpi slt, %9, %26 : vector<1x32xi32>
    %28 = arith.andi %25, %27 : vector<1x32xi1>
    %29 = arith.extui %28 : vector<1x32xi1> to vector<1x32xi32>
    %30 = arith.sitofp %29 : vector<1x32xi32> to vector<1x32xf32>
    %c24_i32_5 = arith.constant 24 : i32
    %31 = vector.broadcast %c24_i32_5 : i32 to vector<1x32xi32>
    %32 = arith.cmpi sge, %9, %31 : vector<1x32xi32>
    %c32_i32 = arith.constant 32 : i32
    %33 = vector.broadcast %c32_i32 : i32 to vector<1x32xi32>
    %34 = arith.cmpi slt, %9, %33 : vector<1x32xi32>
    %35 = arith.andi %32, %34 : vector<1x32xi1>
    %36 = arith.extui %35 : vector<1x32xi1> to vector<1x32xi32>
    %37 = arith.sitofp %36 : vector<1x32xi32> to vector<1x32xf32>
    %c0_6 = arith.constant 0 : index
    %c0_7 = arith.constant 0 : index
    %38 = vector.load %arg2[%c0_6, %c0_7] : memref<64x128xf32, #tpu.memory_space<vmem>>, vector<1x32xf32>
    %c1 = arith.constant 1 : index
    %c0_8 = arith.constant 0 : index
    %39 = vector.load %arg2[%c1, %c0_8] : memref<64x128xf32, #tpu.memory_space<vmem>>, vector<1x32xf32>
    %c2 = arith.constant 2 : index
    %c0_9 = arith.constant 0 : index
    %40 = vector.load %arg2[%c2, %c0_9] : memref<64x128xf32, #tpu.memory_space<vmem>>, vector<1x32xf32>
    %c3 = arith.constant 3 : index
    %c0_10 = arith.constant 0 : index
    %41 = vector.load %arg2[%c3, %c0_10] : memref<64x128xf32, #tpu.memory_space<vmem>>, vector<1x32xf32>
    %c24 = arith.constant 24 : index
    %c0_11 = arith.constant 0 : index
    %42 = vector.load %arg2[%c24, %c0_11] : memref<64x128xf32, #tpu.memory_space<vmem>>, vector<8x8xf32>
    %c32 = arith.constant 32 : index
    %c0_12 = arith.constant 0 : index
    %43 = vector.load %arg2[%c32, %c0_12] : memref<64x128xf32, #tpu.memory_space<vmem>>, vector<8x8xf32>
    %c40 = arith.constant 40 : index
    %c0_13 = arith.constant 0 : index
    %44 = vector.load %arg2[%c40, %c0_13] : memref<64x128xf32, #tpu.memory_space<vmem>>, vector<8x8xf32>
    %c48 = arith.constant 48 : index
    %c0_14 = arith.constant 0 : index
    %45 = vector.load %arg2[%c48, %c0_14] : memref<64x128xf32, #tpu.memory_space<vmem>>, vector<8x8xf32>
    %c56 = arith.constant 56 : index
    %c0_15 = arith.constant 0 : index
    %46 = vector.load %arg2[%c56, %c0_15] : memref<64x128xf32, #tpu.memory_space<vmem>>, vector<8x8xf32>
    %c16 = arith.constant 16 : index
    %c0_16 = arith.constant 0 : index
    %47 = vector.load %arg2[%c16, %c0_16] : memref<64x128xf32, #tpu.memory_space<vmem>>, vector<8x1xf32>
    %48 = tpu.concatenate %47, %47 in 0 : vector<8x1xf32>, vector<8x1xf32> -> vector<16x1xf32>
    %cst = arith.constant dense<0.000000e+00> : vector<16xf32>
    %49 = vector.multi_reduction <add>, %0, %cst [1] : vector<16x32xf32> to vector<16xf32>
    %50 = vector.shape_cast %49 : vector<16xf32> to vector<16x1xf32>
    %cst_17 = arith.constant 3.200000e+01 : f32
    %51 = vector.broadcast %cst_17 : f32 to vector<16x1xf32>
    %52 = arith.divf %50, %51 : vector<16x1xf32>
    %53 = vector.broadcast %52 : vector<16x1xf32> to vector<16x32xf32>
    %54 = arith.subf %0, %53 : vector<16x32xf32>
    %55 = arith.mulf %54, %54 : vector<16x32xf32>
    %cst_18 = arith.constant dense<0.000000e+00> : vector<16xf32>
    %56 = vector.multi_reduction <add>, %55, %cst_18 [1] : vector<16x32xf32> to vector<16xf32>
    %57 = vector.shape_cast %56 : vector<16xf32> to vector<16x1xf32>
    %cst_19 = arith.constant 3.200000e+01 : f32
    %58 = vector.broadcast %cst_19 : f32 to vector<16x1xf32>
    %59 = arith.divf %57, %58 : vector<16x1xf32>
    %60 = vector.broadcast %52 : vector<16x1xf32> to vector<16x32xf32>
    %61 = arith.subf %0, %60 : vector<16x32xf32>
    %cst_20 = arith.constant 9.99999974E-6 : f32
    %62 = vector.broadcast %cst_20 : f32 to vector<16x1xf32>
    %63 = arith.addf %59, %62 : vector<16x1xf32>
    %64 = math.rsqrt %63 : vector<16x1xf32>
    %65 = vector.broadcast %64 : vector<16x1xf32> to vector<16x32xf32>
    %66 = arith.mulf %61, %65 : vector<16x32xf32>
    %67 = vector.broadcast %38 : vector<1x32xf32> to vector<16x32xf32>
    %68 = arith.mulf %66, %67 : vector<16x32xf32>
    %69 = vector.broadcast %39 : vector<1x32xf32> to vector<16x32xf32>
    %70 = arith.addf %68, %69 : vector<16x32xf32>
    %c1_i32 = arith.constant 1 : i32
    %71 = tpu.dynamic_rotate %70 by %c1_i32 dim 0 : vector<16x32xf32>, i32 -> vector<16x32xf32>
    %cst_21 = arith.constant 0.000000e+00 : f32
    %72 = vector.shape_cast %5 : vector<16x1xi1> to vector<16x1xi1>
    %73 = vector.broadcast %72 : vector<16x1xi1> to vector<16x32xi1>
    %74 = vector.broadcast %cst_21 : f32 to vector<16x32xf32>
    %75 = arith.select %73, %74, %71 : vector<16x32xi1>, vector<16x32xf32>
    %76 = arith.select %8, %75, %70 : vector<16x32xi1>, vector<16x32xf32>
    %c0_22 = arith.constant 0 : index
    %c0_23 = arith.constant 0 : index
    %77 = vector.load %arg3[%c0_22, %c0_23] : memref<304x128xf32, #tpu.memory_space<vmem>>, vector<32x32xf32>
    %c4 = arith.constant 4 : index
    %c0_24 = arith.constant 0 : index
    %78 = vector.load %arg2[%c4, %c0_24] : memref<64x128xf32, #tpu.memory_space<vmem>>, vector<1x32xf32>
    %cst_25 = arith.constant dense<0.000000e+00> : vector<16x32xf32>
    %79 = tpu.matmul %76, %77, %cst_25 {dimension_numbers = #tpu.dot_dimension_numbers<[1], [0], [0], [1], [0, 0, 1, 1], [], []>} : vector<16x32xf32>, vector<32x32xf32>, vector<16x32xf32> -> vector<16x32xf32>
    %80 = vector.broadcast %78 : vector<1x32xf32> to vector<16x32xf32>
    %81 = arith.addf %79, %80 : vector<16x32xf32>
    %c32_26 = arith.constant 32 : index
    %c0_27 = arith.constant 0 : index
    %82 = vector.load %arg3[%c32_26, %c0_27] : memref<304x128xf32, #tpu.memory_space<vmem>>, vector<32x32xf32>
    %c5 = arith.constant 5 : index
    %c0_28 = arith.constant 0 : index
    %83 = vector.load %arg2[%c5, %c0_28] : memref<64x128xf32, #tpu.memory_space<vmem>>, vector<1x32xf32>
    %cst_29 = arith.constant dense<0.000000e+00> : vector<16x32xf32>
    %84 = tpu.matmul %76, %82, %cst_29 {dimension_numbers = #tpu.dot_dimension_numbers<[1], [0], [0], [1], [0, 0, 1, 1], [], []>} : vector<16x32xf32>, vector<32x32xf32>, vector<16x32xf32> -> vector<16x32xf32>
    %85 = vector.broadcast %83 : vector<1x32xf32> to vector<16x32xf32>
    %86 = arith.addf %84, %85 : vector<16x32xf32>
    %c64 = arith.constant 64 : index
    %c0_30 = arith.constant 0 : index
    %87 = vector.load %arg3[%c64, %c0_30] : memref<304x128xf32, #tpu.memory_space<vmem>>, vector<32x32xf32>
    %c6 = arith.constant 6 : index
    %c0_31 = arith.constant 0 : index
    %88 = vector.load %arg2[%c6, %c0_31] : memref<64x128xf32, #tpu.memory_space<vmem>>, vector<1x32xf32>
    %cst_32 = arith.constant dense<0.000000e+00> : vector<16x32xf32>
    %89 = tpu.matmul %76, %87, %cst_32 {dimension_numbers = #tpu.dot_dimension_numbers<[1], [0], [0], [1], [0, 0, 1, 1], [], []>} : vector<16x32xf32>, vector<32x32xf32>, vector<16x32xf32> -> vector<16x32xf32>
    %90 = vector.broadcast %88 : vector<1x32xf32> to vector<16x32xf32>
    %91 = arith.addf %89, %90 : vector<16x32xf32>
    %cst_33 = arith.constant -6.000000e+01 : f32
    %cst_34 = arith.constant 3.000000e+01 : f32
    %92 = vector.broadcast %cst_33 : f32 to vector<16x32xf32>
    %93 = arith.maximumf %92, %81 : vector<16x32xf32>
    %94 = vector.broadcast %cst_34 : f32 to vector<16x32xf32>
    %95 = arith.minimumf %94, %93 : vector<16x32xf32>
    %96 = math.exp %95 : vector<16x32xf32>
    %97 = arith.mulf %96, %86 : vector<16x32xf32>
    %98 = arith.negf %91 : vector<16x32xf32>
    %99 = math.exp %98 : vector<16x32xf32>
    %cst_35 = arith.constant 1.000000e+00 : f32
    %100 = vector.broadcast %cst_35 : f32 to vector<16x32xf32>
    %101 = arith.addf %100, %99 : vector<16x32xf32>
    %102 = arith.divf %100, %101 : vector<16x32xf32>
    %103 = vector.extract_strided_slice %96 {offsets = [0, 0], sizes = [8, 32], strides = [1, 1]} : vector<16x32xf32> to vector<8x32xf32>
    %104 = vector.extract_strided_slice %97 {offsets = [0, 0], sizes = [8, 32], strides = [1, 1]} : vector<16x32xf32> to vector<8x32xf32>
    %105 = vector.extract_strided_slice %102 {offsets = [0, 0], sizes = [8, 32], strides = [1, 1]} : vector<16x32xf32> to vector<8x32xf32>
    %cst_36 = arith.constant dense<0.000000e+00> : vector<8x32xf32>
    %106 = tpu.matmul %42, %103, %cst_36 {dimension_numbers = #tpu.dot_dimension_numbers<[1], [0], [0], [1], [0, 0, 1, 1], [], []>} : vector<8x8xf32>, vector<8x32xf32>, vector<8x32xf32> -> vector<8x32xf32>
    %cst_37 = arith.constant dense<0.000000e+00> : vector<8x32xf32>
    %107 = tpu.matmul %43, %104, %cst_37 {dimension_numbers = #tpu.dot_dimension_numbers<[1], [0], [0], [1], [0, 0, 1, 1], [], []>} : vector<8x8xf32>, vector<8x32xf32>, vector<8x32xf32> -> vector<8x32xf32>
    %108 = vector.broadcast %16 : vector<1x32xf32> to vector<8x32xf32>
    %109 = arith.mulf %108, %107 : vector<8x32xf32>
    %cst_38 = arith.constant dense<0.000000e+00> : vector<8x32xf32>
    %110 = tpu.matmul %44, %104, %cst_38 {dimension_numbers = #tpu.dot_dimension_numbers<[1], [0], [0], [1], [0, 0, 1, 1], [], []>} : vector<8x8xf32>, vector<8x32xf32>, vector<8x32xf32> -> vector<8x32xf32>
    %111 = vector.broadcast %23 : vector<1x32xf32> to vector<8x32xf32>
    %112 = arith.mulf %111, %110 : vector<8x32xf32>
    %113 = arith.addf %109, %112 : vector<8x32xf32>
    %cst_39 = arith.constant dense<0.000000e+00> : vector<8x32xf32>
    %114 = tpu.matmul %45, %104, %cst_39 {dimension_numbers = #tpu.dot_dimension_numbers<[1], [0], [0], [1], [0, 0, 1, 1], [], []>} : vector<8x8xf32>, vector<8x32xf32>, vector<8x32xf32> -> vector<8x32xf32>
    %115 = vector.broadcast %30 : vector<1x32xf32> to vector<8x32xf32>
    %116 = arith.mulf %115, %114 : vector<8x32xf32>
    %117 = arith.addf %113, %116 : vector<8x32xf32>
    %cst_40 = arith.constant dense<0.000000e+00> : vector<8x32xf32>
    %118 = tpu.matmul %46, %104, %cst_40 {dimension_numbers = #tpu.dot_dimension_numbers<[1], [0], [0], [1], [0, 0, 1, 1], [], []>} : vector<8x8xf32>, vector<8x32xf32>, vector<8x32xf32> -> vector<8x32xf32>
    %119 = vector.broadcast %37 : vector<1x32xf32> to vector<8x32xf32>
    %120 = arith.mulf %119, %118 : vector<8x32xf32>
    %121 = arith.addf %117, %120 : vector<8x32xf32>
    %122 = arith.mulf %105, %121 : vector<8x32xf32>
    %123 = tpu.reciprocal %106 : vector<8x32xf32> -> vector<8x32xf32>
    %124 = arith.mulf %122, %123 : vector<8x32xf32>
    %125 = vector.extract_strided_slice %96 {offsets = [8, 0], sizes = [8, 32], strides = [1, 1]} : vector<16x32xf32> to vector<8x32xf32>
    %126 = vector.extract_strided_slice %97 {offsets = [8, 0], sizes = [8, 32], strides = [1, 1]} : vector<16x32xf32> to vector<8x32xf32>
    %127 = vector.extract_strided_slice %102 {offsets = [8, 0], sizes = [8, 32], strides = [1, 1]} : vector<16x32xf32> to vector<8x32xf32>
    %cst_41 = arith.constant dense<0.000000e+00> : vector<8x32xf32>
    %128 = tpu.matmul %42, %125, %cst_41 {dimension_numbers = #tpu.dot_dimension_numbers<[1], [0], [0], [1], [0, 0, 1, 1], [], []>} : vector<8x8xf32>, vector<8x32xf32>, vector<8x32xf32> -> vector<8x32xf32>
    %cst_42 = arith.constant dense<0.000000e+00> : vector<8x32xf32>
    %129 = tpu.matmul %43, %126, %cst_42 {dimension_numbers = #tpu.dot_dimension_numbers<[1], [0], [0], [1], [0, 0, 1, 1], [], []>} : vector<8x8xf32>, vector<8x32xf32>, vector<8x32xf32> -> vector<8x32xf32>
    %130 = vector.broadcast %16 : vector<1x32xf32> to vector<8x32xf32>
    %131 = arith.mulf %130, %129 : vector<8x32xf32>
    %cst_43 = arith.constant dense<0.000000e+00> : vector<8x32xf32>
    %132 = tpu.matmul %44, %126, %cst_43 {dimension_numbers = #tpu.dot_dimension_numbers<[1], [0], [0], [1], [0, 0, 1, 1], [], []>} : vector<8x8xf32>, vector<8x32xf32>, vector<8x32xf32> -> vector<8x32xf32>
    %133 = vector.broadcast %23 : vector<1x32xf32> to vector<8x32xf32>
    %134 = arith.mulf %133, %132 : vector<8x32xf32>
    %135 = arith.addf %131, %134 : vector<8x32xf32>
    %cst_44 = arith.constant dense<0.000000e+00> : vector<8x32xf32>
    %136 = tpu.matmul %45, %126, %cst_44 {dimension_numbers = #tpu.dot_dimension_numbers<[1], [0], [0], [1], [0, 0, 1, 1], [], []>} : vector<8x8xf32>, vector<8x32xf32>, vector<8x32xf32> -> vector<8x32xf32>
    %137 = vector.broadcast %30 : vector<1x32xf32> to vector<8x32xf32>
    %138 = arith.mulf %137, %136 : vector<8x32xf32>
    %139 = arith.addf %135, %138 : vector<8x32xf32>
    %cst_45 = arith.constant dense<0.000000e+00> : vector<8x32xf32>
    %140 = tpu.matmul %46, %126, %cst_45 {dimension_numbers = #tpu.dot_dimension_numbers<[1], [0], [0], [1], [0, 0, 1, 1], [], []>} : vector<8x8xf32>, vector<8x32xf32>, vector<8x32xf32> -> vector<8x32xf32>
    %141 = vector.broadcast %37 : vector<1x32xf32> to vector<8x32xf32>
    %142 = arith.mulf %141, %140 : vector<8x32xf32>
    %143 = arith.addf %139, %142 : vector<8x32xf32>
    %144 = arith.mulf %127, %143 : vector<8x32xf32>
    %145 = tpu.reciprocal %128 : vector<8x32xf32> -> vector<8x32xf32>
    %146 = arith.mulf %144, %145 : vector<8x32xf32>
    %147 = tpu.concatenate %124, %146 in 0 : vector<8x32xf32>, vector<8x32xf32> -> vector<16x32xf32>
    %c96 = arith.constant 96 : index
    %c0_46 = arith.constant 0 : index
    %148 = vector.load %arg3[%c96, %c0_46] : memref<304x128xf32, #tpu.memory_space<vmem>>, vector<32x32xf32>
    %c7 = arith.constant 7 : index
    %c0_47 = arith.constant 0 : index
    %149 = vector.load %arg2[%c7, %c0_47] : memref<64x128xf32, #tpu.memory_space<vmem>>, vector<1x32xf32>
    %cst_48 = arith.constant dense<0.000000e+00> : vector<16x32xf32>
    %150 = tpu.matmul %147, %148, %cst_48 {dimension_numbers = #tpu.dot_dimension_numbers<[1], [0], [0], [1], [0, 0, 1, 1], [], []>} : vector<16x32xf32>, vector<32x32xf32>, vector<16x32xf32> -> vector<16x32xf32>
    %151 = vector.broadcast %149 : vector<1x32xf32> to vector<16x32xf32>
    %152 = arith.addf %150, %151 : vector<16x32xf32>
    %153 = vector.broadcast %48 : vector<16x1xf32> to vector<16x32xf32>
    %154 = arith.mulf %152, %153 : vector<16x32xf32>
    %155 = arith.addf %0, %154 : vector<16x32xf32>
    %cst_49 = arith.constant dense<0.000000e+00> : vector<16xf32>
    %156 = vector.multi_reduction <add>, %155, %cst_49 [1] : vector<16x32xf32> to vector<16xf32>
    %157 = vector.shape_cast %156 : vector<16xf32> to vector<16x1xf32>
    %cst_50 = arith.constant 3.200000e+01 : f32
    %158 = vector.broadcast %cst_50 : f32 to vector<16x1xf32>
    %159 = arith.divf %157, %158 : vector<16x1xf32>
    %160 = vector.broadcast %159 : vector<16x1xf32> to vector<16x32xf32>
    %161 = arith.subf %155, %160 : vector<16x32xf32>
    %162 = arith.mulf %161, %161 : vector<16x32xf32>
    %cst_51 = arith.constant dense<0.000000e+00> : vector<16xf32>
    %163 = vector.multi_reduction <add>, %162, %cst_51 [1] : vector<16x32xf32> to vector<16xf32>
    %164 = vector.shape_cast %163 : vector<16xf32> to vector<16x1xf32>
    %cst_52 = arith.constant 3.200000e+01 : f32
    %165 = vector.broadcast %cst_52 : f32 to vector<16x1xf32>
    %166 = arith.divf %164, %165 : vector<16x1xf32>
    %167 = vector.broadcast %159 : vector<16x1xf32> to vector<16x32xf32>
    %168 = arith.subf %155, %167 : vector<16x32xf32>
    %cst_53 = arith.constant 9.99999974E-6 : f32
    %169 = vector.broadcast %cst_53 : f32 to vector<16x1xf32>
    %170 = arith.addf %166, %169 : vector<16x1xf32>
    %171 = math.rsqrt %170 : vector<16x1xf32>
    %172 = vector.broadcast %171 : vector<16x1xf32> to vector<16x32xf32>
    %173 = arith.mulf %168, %172 : vector<16x32xf32>
    %174 = vector.broadcast %40 : vector<1x32xf32> to vector<16x32xf32>
    %175 = arith.mulf %173, %174 : vector<16x32xf32>
    %176 = vector.broadcast %41 : vector<1x32xf32> to vector<16x32xf32>
    %177 = arith.addf %175, %176 : vector<16x32xf32>
    %c1_i32_54 = arith.constant 1 : i32
    %178 = tpu.dynamic_rotate %177 by %c1_i32_54 dim 0 : vector<16x32xf32>, i32 -> vector<16x32xf32>
    %cst_55 = arith.constant 0.000000e+00 : f32
    %179 = vector.shape_cast %5 : vector<16x1xi1> to vector<16x1xi1>
    %180 = vector.broadcast %179 : vector<16x1xi1> to vector<16x32xi1>
    %181 = vector.broadcast %cst_55 : f32 to vector<16x32xf32>
    %182 = arith.select %180, %181, %178 : vector<16x32xi1>, vector<16x32xf32>
    %183 = arith.select %8, %182, %177 : vector<16x32xi1>, vector<16x32xf32>
    %c128 = arith.constant 128 : index
    %c0_56 = arith.constant 0 : index
    %184 = vector.load %arg3[%c128, %c0_56] : memref<304x128xf32, #tpu.memory_space<vmem>>, vector<32x80xf32>
    %c8 = arith.constant 8 : index
    %c0_57 = arith.constant 0 : index
    %185 = vector.load %arg2[%c8, %c0_57] : memref<64x128xf32, #tpu.memory_space<vmem>>, vector<1x80xf32>
    %cst_58 = arith.constant dense<0.000000e+00> : vector<16x80xf32>
    %186 = tpu.matmul %183, %184, %cst_58 {dimension_numbers = #tpu.dot_dimension_numbers<[1], [0], [0], [1], [0, 0, 1, 1], [], []>} : vector<16x32xf32>, vector<32x80xf32>, vector<16x80xf32> -> vector<16x80xf32>
    %187 = vector.broadcast %185 : vector<1x80xf32> to vector<16x80xf32>
    %188 = arith.addf %186, %187 : vector<16x80xf32>
    %c160 = arith.constant 160 : index
    %c0_59 = arith.constant 0 : index
    %189 = vector.load %arg3[%c160, %c0_59] : memref<304x128xf32, #tpu.memory_space<vmem>>, vector<32x80xf32>
    %c9 = arith.constant 9 : index
    %c0_60 = arith.constant 0 : index
    %190 = vector.load %arg2[%c9, %c0_60] : memref<64x128xf32, #tpu.memory_space<vmem>>, vector<1x80xf32>
    %cst_61 = arith.constant dense<0.000000e+00> : vector<16x80xf32>
    %191 = tpu.matmul %183, %189, %cst_61 {dimension_numbers = #tpu.dot_dimension_numbers<[1], [0], [0], [1], [0, 0, 1, 1], [], []>} : vector<16x32xf32>, vector<32x80xf32>, vector<16x80xf32> -> vector<16x80xf32>
    %192 = vector.broadcast %190 : vector<1x80xf32> to vector<16x80xf32>
    %193 = arith.addf %191, %192 : vector<16x80xf32>
    %cst_62 = arith.constant 2.000000e+01 : f32
    %194 = vector.broadcast %cst_62 : f32 to vector<16x80xf32>
    %195 = arith.minimumf %188, %194 : vector<16x80xf32>
    %196 = math.exp %195 : vector<16x80xf32>
    %cst_63 = arith.constant 2.000000e+00 : f32
    %197 = vector.broadcast %cst_63 : f32 to vector<16x80xf32>
    %198 = arith.addf %196, %197 : vector<16x80xf32>
    %199 = arith.mulf %196, %198 : vector<16x80xf32>
    %200 = arith.mulf %188, %199 : vector<16x80xf32>
    %cst_64 = arith.constant 2.000000e+00 : f32
    %201 = vector.broadcast %cst_64 : f32 to vector<16x80xf32>
    %202 = arith.addf %199, %201 : vector<16x80xf32>
    %203 = tpu.reciprocal %202 : vector<16x80xf32> -> vector<16x80xf32>
    %204 = arith.mulf %200, %203 : vector<16x80xf32>
    %205 = arith.mulf %204, %193 : vector<16x80xf32>
    %c192 = arith.constant 192 : index
    %c0_65 = arith.constant 0 : index
    %206 = vector.load %arg3[%c192, %c0_65] : memref<304x128xf32, #tpu.memory_space<vmem>>, vector<80x32xf32>
    %c10 = arith.constant 10 : index
    %c0_66 = arith.constant 0 : index
    %207 = vector.load %arg2[%c10, %c0_66] : memref<64x128xf32, #tpu.memory_space<vmem>>, vector<1x32xf32>
    %cst_67 = arith.constant dense<0.000000e+00> : vector<16x32xf32>
    %208 = tpu.matmul %205, %206, %cst_67 {dimension_numbers = #tpu.dot_dimension_numbers<[1], [0], [0], [1], [0, 0, 1, 1], [], []>} : vector<16x80xf32>, vector<80x32xf32>, vector<16x32xf32> -> vector<16x32xf32>
    %209 = vector.broadcast %207 : vector<1x32xf32> to vector<16x32xf32>
    %210 = arith.addf %208, %209 : vector<16x32xf32>
    %c272 = arith.constant 272 : index
    %c0_68 = arith.constant 0 : index
    %211 = vector.load %arg3[%c272, %c0_68] : memref<304x128xf32, #tpu.memory_space<vmem>>, vector<32x32xf32>
    %c11 = arith.constant 11 : index
    %c0_69 = arith.constant 0 : index
    %212 = vector.load %arg2[%c11, %c0_69] : memref<64x128xf32, #tpu.memory_space<vmem>>, vector<1x32xf32>
    %cst_70 = arith.constant dense<0.000000e+00> : vector<16x32xf32>
    %213 = tpu.matmul %183, %211, %cst_70 {dimension_numbers = #tpu.dot_dimension_numbers<[1], [0], [0], [1], [0, 0, 1, 1], [], []>} : vector<16x32xf32>, vector<32x32xf32>, vector<16x32xf32> -> vector<16x32xf32>
    %214 = vector.broadcast %212 : vector<1x32xf32> to vector<16x32xf32>
    %215 = arith.addf %213, %214 : vector<16x32xf32>
    %216 = arith.negf %215 : vector<16x32xf32>
    %217 = math.exp %216 : vector<16x32xf32>
    %cst_71 = arith.constant 1.000000e+00 : f32
    %218 = vector.broadcast %cst_71 : f32 to vector<16x32xf32>
    %219 = arith.addf %218, %217 : vector<16x32xf32>
    %220 = arith.divf %218, %219 : vector<16x32xf32>
    %221 = arith.mulf %220, %210 : vector<16x32xf32>
    %222 = arith.addf %155, %221 : vector<16x32xf32>
    %c0_72 = arith.constant 0 : index
    %c0_73 = arith.constant 0 : index
    %223 = vector.load %arg4[%c0_72, %c0_73] : memref<16x32xf32, #tpu.memory_space<vmem>>, vector<16x32xf32>
    tpu.vector_store %arg4[%c0_72, %c0_73], %222 {strides = array<i32>} : memref<16x32xf32, #tpu.memory_space<vmem>>, vector<16x32xf32>,
    return
  }
  func.func @transform_0(%arg0: i32) -> (i32, i32) {
    %c0_i32 = arith.constant 0 : i32
    %c0_i32_0 = arith.constant 0 : i32
    return %arg0, %c0_i32 : i32, i32
  }
  func.func @transform_1(%arg0: i32) -> (i32, i32) {
    %c0_i32 = arith.constant 0 : i32
    %c0_i32_0 = arith.constant 0 : i32
    %c0_i32_1 = arith.constant 0 : i32
    return %c0_i32, %c0_i32_0 : i32, i32
  }
  func.func @transform_2(%arg0: i32) -> (i32, i32) {
    %c0_i32 = arith.constant 0 : i32
    %c0_i32_0 = arith.constant 0 : i32
    %c0_i32_1 = arith.constant 0 : i32
    return %c0_i32, %c0_i32_0 : i32, i32
  }
  func.func @transform_3(%arg0: i32) -> (i32, i32) {
    %c0_i32 = arith.constant 0 : i32
    %c0_i32_0 = arith.constant 0 : i32
    return %arg0, %c0_i32 : i32, i32
  }
}

</mosaic_0001>

<llo_original>
// kernel: tpu_custom_call.1
$region0: #{tpu_custom_call.1}
  #allocation0 [shape = 'u32[]', space=smem, size = 0x4, offset = 0x4, fixed_abs, tag = 'smem constant byte address 0x4 - core index']
  #allocation1 [shape = 'u32[72,128]{1,0:T(1,128)}', space=vmem, size = 0x9000, scoped, tag = 'internal scratch']
  %s0 = inlined_call_operand.hbm [shape: f32[16,32], index: 0, kind: input, shape index: {}]
  %s1 = inlined_call_operand.hbm [shape: f32[64,128], index: 1, kind: input, shape index: {}]
  %s2 = inlined_call_operand.hbm [shape: f32[304,128], index: 2, kind: input, shape index: {}]
  %s3 = inlined_call_operand.hbm [shape: f32[16,32], index: 3, kind: output, shape index: {}]
  %s4 = sld [smem:[#allocation0]]
  $region34: #{tpu_custom_call.1} parent=0
    _
  %s6 = ssub.s32 1, %s4
  %s7 = scalar_select 0, %s6, %s4
  $region1: #{tpu_custom_call.1} parent=0
    #allocation2 [shape = 'u8[8192]{0}', space=vmem, size = 0x2000, scoped, tag = 'input window, operand 0, single buffered']
    #allocation3 [shape = 's32[1]{0}', space=sflag, size = 0x4, scoped, tag = 'scoped memory for tpu_custom_call.1']
    #allocation4 [shape = 's32[1]{0}', space=sflag, size = 0x4, scoped, tag = 'scoped memory for tpu_custom_call.1']
    #allocation5 [shape = 'u8[32768]{0}', space=vmem, size = 0x8000, scoped, tag = 'input window, operand 1, single buffered']
    #allocation6 [shape = 's32[1]{0}', space=sflag, size = 0x4, scoped, tag = 'scoped memory for tpu_custom_call.1']
    #allocation7 [shape = 'u8[155648]{0}', space=vmem, size = 0x26000, scoped, tag = 'input window, operand 2, single buffered']
    #allocation8 [shape = 'u8[8192]{0}', space=vmem, size = 0x2000, scoped, tag = 'output window, operand 0, single buffered']
    %8 = vsyncpa [#allocation3], 0
    %9 = vsyncpa [#allocation6], 0
    %10 = vsyncpa [#allocation4], 0
    // Predicated region
    $region2: #{tpu_custom_call.1} parent=1 // pred_check
      _
    $region3: #{tpu_custom_call.1} parent=1 // pred_check_branch
      %12 = sbr.rel (0) target = $region5
    $region4: #{tpu_custom_call.1} parent=1 // pred_region
      %14 = vsyncadd [#allocation3], 0
      %s15 = sshll.u32 %s0, 4
      %s16 = int_to_ptr.hbm [resolvable:$true] %s15
      %s17 = sshll.u32 [#allocation2], 4
      %s18 = int_to_ptr.vmem [resolvable:$true] %s17
      %23 = dma.hbm_to_vmem [thread:$0]  %s16, 256, %s18, [#allocation3], 128, 128, 8
    $region5: #{tpu_custom_call.1} parent=1 // pred_fallthru
      _
    // Predicated region
    $region6: #{tpu_custom_call.1} parent=1 // pred_check
      _
    $region7: #{tpu_custom_call.1} parent=1 // pred_check_branch
      %25 = sbr.rel (0) target = $region9
    $region8: #{tpu_custom_call.1} parent=1 // pred_region
      %27 = vsyncadd [#allocation6], 0
      %s28 = sshll.u32 %s1, 4
      %s29 = int_to_ptr.hbm [resolvable:$true] %s28
      %s30 = sshll.u32 [#allocation5], 4
      %s31 = int_to_ptr.vmem [resolvable:$true] %s30
      %36 = dma.hbm_to_vmem [thread:$0]  %s29, 1024, %s31, [#allocation6], 128, 128, 8
    $region9: #{tpu_custom_call.1} parent=1 // pred_fallthru
      _
    // Predicated region
    $region10: #{tpu_custom_call.1} parent=1 // pred_check
      _
    $region11: #{tpu_custom_call.1} parent=1 // pred_check_branch
      %38 = sbr.rel (0) target = $region13
    $region12: #{tpu_custom_call.1} parent=1 // pred_region
      %40 = vsyncadd [#allocation6], 0
      %s41 = sshll.u32 %s2, 4
      %s42 = int_to_ptr.hbm [resolvable:$true] %s41
      %s43 = sshll.u32 [#allocation7], 4
      %s44 = int_to_ptr.vmem [resolvable:$true] %s43
      %49 = dma.hbm_to_vmem [thread:$0]  %s42, 4864, %s44, [#allocation6], 128, 128, 8
    $region13: #{tpu_custom_call.1} parent=1 // pred_fallthru
      _
    // Predicated region
    $region14: #{tpu_custom_call.1} parent=1 // pred_check
      _
    $region15: #{tpu_custom_call.1} parent=1 // pred_check_branch
      %51 = sbr.rel (0) target = $region17
    $region16: #{tpu_custom_call.1} parent=1 // pred_region
      %53 = dma.done [#allocation3], 256
    $region17: #{tpu_custom_call.1} parent=1 // pred_fallthru
      _
    // Predicated region
    $region18: #{tpu_custom_call.1} parent=1 // pred_check
      _
    $region19: #{tpu_custom_call.1} parent=1 // pred_check_branch
      %55 = sbr.rel (0) target = $region21
    $region20: #{tpu_custom_call.1} parent=1 // pred_region
      %57 = dma.done [#allocation6], 1024
    $region21: #{tpu_custom_call.1} parent=1 // pred_fallthru
      _
    // Predicated region
    $region22: #{tpu_custom_call.1} parent=1 // pred_check
      _
    $region23: #{tpu_custom_call.1} parent=1 // pred_check_branch
      %59 = sbr.rel (0) target = $region25
    $region24: #{tpu_custom_call.1} parent=1 // pred_region
      %61 = dma.done [#allocation6], 4864
    $region25: #{tpu_custom_call.1} parent=1 // pred_fallthru
      _
    %v62 = vld [vmem:[#allocation2] sm:$0xff]
    %v63 = vld [vmem:[#allocation2 + $0x8] sm:$0xff]
    %v64 = vlaneseq
    %v65 = vshrl.u32 %v64, 7
    %v66 = vadd.s32 %v65, 8
    %v67 = vand.u32 %v65, 7
    %v68 = vand.u32 %v66, 7
    %vm69 = vcmp.eq.s32.totalorder %v67, 0
    %vm70 = vcmp.eq.s32.totalorder %v68, 0
    %v71 = vlaneseq
    %v72 = vand.u32 %v71, 127
    %vm73 = vcmp.lt.s32.totalorder %v72, 16
    %vm74 = vcmp.ge.s32.totalorder %v72, 0
    %vm75 = vcmp.lt.s32.totalorder %v72, 8
    %vm76 = vmand %vm74, %vm75
    %v77 = vsel %vm76, 1, 0
    %v78 = vcvt.s32.f32 %v77
    %vm79 = vcmp.ge.s32.totalorder %v72, 8
    %vm80 = vmand %vm79, %vm73
    %v81 = vsel %vm80, 1, 0
    %v82 = vcvt.s32.f32 %v81
    %vm83 = vcmp.ge.s32.totalorder %v72, 16
    %vm84 = vcmp.lt.s32.totalorder %v72, 24
    %vm85 = vmand %vm83, %vm84
    %v86 = vsel %vm85, 1, 0
    %v87 = vcvt.s32.f32 %v86
    %vm88 = vcmp.ge.s32.totalorder %v72, 24
    %vm89 = vcmp.lt.s32.totalorder %v72, 32
    %vm90 = vmand %vm88, %vm89
    %v91 = vsel %vm90, 1, 0
    %v92 = vcvt.s32.f32 %v91
    %v93 = vld [vmem:[#allocation5] sm:$0x1]
    %v94 = vld [vmem:[#allocation5 + $0x1] sm:$0x1]
    %v95 = vld [vmem:[#allocation5 + $0x2] sm:$0x1]
    %v96 = vld [vmem:[#allocation5 + $0x3] sm:$0x1]
    %v97 = vld [vmem:[#allocation5 + $0x18] sm:$0xff]
    %v98 = vld [vmem:[#allocation5 + $0x20] sm:$0xff]
    %v99 = vld [vmem:[#allocation5 + $0x28] sm:$0xff]
    %v100 = vld [vmem:[#allocation5 + $0x30] sm:$0xff]
    %v101 = vld [vmem:[#allocation5 + $0x38] sm:$0xff]
    %v102 = vld [vmem:[#allocation5 + $0x10] sm:$0xff]
    %vm103 = vcmask 261120
    %v104 = vsel %vm103, %v62, 0.0
    %105 = vadd.xlane.f32.xlu0 %v104
    %v106 = vpop.xlane.xlu0 %105
    %v107 = vsel %vm103, %v63, 0.0
    %108 = vadd.xlane.f32.xlu0 %v107
    %v109 = vpop.xlane.xlu0 %108
    %v110 = vrcp.pop 32.0
    %v111 = vmul.f32 32.0, %v110
    %v112 = vsub.f32 1.0, %v111
    %v113 = vmul.f32 %v110, %v112
    %v114 = vadd.f32 %v110, %v113
    %vm115 = vweird.f32 %v110
    %v116 = vsel %vm115, %v110, %v114
    %v117 = vmul.f32 %v106, %v116
    %v118 = vmul.f32 %v109, %v116
    %v119 = vsub.f32 %v62, %v117
    %v120 = vsub.f32 %v63, %v118
    %v121 = vmul.f32 %v119, %v119
    %v122 = vmul.f32 %v120, %v120
    %v123 = vsel %vm103, %v121, 0.0
    %124 = vadd.xlane.f32.xlu0 %v123
    %v125 = vpop.xlane.xlu0 %124
    %v126 = vsel %vm103, %v122, 0.0
    %127 = vadd.xlane.f32.xlu0 %v126
    %v128 = vpop.xlane.xlu0 %127
    %v129 = vmul.f32 %v125, %v116
    %v130 = vmul.f32 %v128, %v116
    %v131 = vadd.f32 %v129, 1e-05
    %v132 = vadd.f32 %v130, 1e-05
    %v133 = vrsqrt.pop %v131
    %v134 = vmul.f32 %v133, %v131
    %v135 = vmul.f32 %v134, %v133
    %v136 = vmul.f32 0.5, %v135
    %v137 = vsub.f32 1.5, %v136
    %v138 = vmul.f32 %v133, %v137
    %vm139 = vweird.f32 %v131
    %vm140 = vweird.f32 %v133
    %vm141 = vmor %vm139, %vm140
    %v142 = vsel %vm141, %v133, %v138
    %v143 = vrsqrt.pop %v132
    %v144 = vmul.f32 %v143, %v132
    %v145 = vmul.f32 %v144, %v143
    %v146 = vmul.f32 0.5, %v145
    %v147 = vsub.f32 1.5, %v146
    %v148 = vmul.f32 %v143, %v147
    %vm149 = vweird.f32 %v132
    %vm150 = vweird.f32 %v143
    %vm151 = vmor %vm149, %vm150
    %v152 = vsel %vm151, %v143, %v148
    %v153 = vmul.f32 %v119, %v142
    %v154 = vmul.f32 %v120, %v152
    %v155 = vperm.slane %v93, 0
    %v156 = vmul.f32 %v153, %v155
    %v157 = vmul.f32 %v154, %v155
    %v158 = vperm.slane %v94, 0
    %v159 = vadd.f32 %v156, %v158
    %v160 = vadd.f32 %v157, %v158
    %v161 = vrot.slane %v159, 7
    %v162 = vrot.slane %v160, 7
    %vm163 = vcmp.lt.s32.totalorder %v65, 1
    %v164 = vsel %vm163, %v161, %v162
    %v165 = vsel %vm163, %v162, %v161
    %v166 = vsel %vm69, 1, 0
    %v167 = vsel %vm70, 1, 0
    %vm168 = vcmp.eq.s32.totalorder %v166, 1
    %vm169 = vcmp.eq.s32.totalorder %v167, 1
    %v170 = vsel %vm168, 0.0, %v165
    %v171 = vsel %vm169, 0.0, %v164
    %v172 = vsel %vm73, %v170, %v159
    %v173 = vsel %vm73, %v171, %v160
    %v174 = vld [vmem:[#allocation7] sm:$0xff]
    %v175 = vld [vmem:[#allocation7 + $0x8] sm:$0xff]
    %v176 = vld [vmem:[#allocation7 + $0x10] sm:$0xff]
    %v177 = vld [vmem:[#allocation7 + $0x18] sm:$0xff]
    %v178 = vld [vmem:[#allocation5 + $0x4] sm:$0x1]
    %v179 = vperm.slane %v178, 0
    %v181 = vsel %vm103, %v172, 0
    %v184 = vsel %vm103, %v173, 0
    %186 = vmatpush.msra.mxu0 0.0
    %187 = vmatpush.msra.mxu0 0.0
    %188 = vmatpush.msra.mxu0 0.0
    %189 = vmatpush.msra.mxu0 0.0
    %190 = vmatpush.msra.mxu0 0.0
    %191 = vmatpush.msra.mxu0 0.0
    %192 = vmatpush.msra.mxu0 0.0
    %193 = vmatpush.msra.mxu0 0.0
    %194 = vmatpush.msra.mxu0 0.0
    %195 = vmatpush.msra.mxu0 0.0
    %196 = vmatpush.msra.mxu0 0.0
    %197 = vmatpush.msra.mxu0 0.0
    %198 = vmatpush.msra.mxu0 %v177
    %199 = vmatpush.msra.mxu0 %v176
    %200 = vmatpush.msra.mxu0 %v175
    %201 = vmatpush.msra.mxu0 %v174
    %202 = vmatmul.f32.gmra.mxu0 %v181
    %v203 = vpop.f32.mrf.mxu0
    %v204 = vadd.f32 %v179, %v203
    %205 = vmatmul.f32.gmra.mxu0 %v184
    %v206 = vpop.f32.mrf.mxu0
    %v207 = vadd.f32 %v179, %v206
    %208 = vdwg.mxu0
    %v209 = vld [vmem:[#allocation7 + $0x20] sm:$0xff]
    %v210 = vld [vmem:[#allocation7 + $0x28] sm:$0xff]
    %v211 = vld [vmem:[#allocation7 + $0x30] sm:$0xff]
    %v212 = vld [vmem:[#allocation7 + $0x38] sm:$0xff]
    %v213 = vld [vmem:[#allocation5 + $0x5] sm:$0x1]
    %v214 = vperm.slane %v213, 0
    %215 = vmatpush.msra.mxu0 0.0
    %216 = vmatpush.msra.mxu0 0.0
    %217 = vmatpush.msra.mxu0 0.0
    %218 = vmatpush.msra.mxu0 0.0
    %219 = vmatpush.msra.mxu0 0.0
    %220 = vmatpush.msra.mxu0 0.0
    %221 = vmatpush.msra.mxu0 0.0
    %222 = vmatpush.msra.mxu0 0.0
    %223 = vmatpush.msra.mxu0 0.0
    %224 = vmatpush.msra.mxu0 0.0
    %225 = vmatpush.msra.mxu0 0.0
    %226 = vmatpush.msra.mxu0 0.0
    %227 = vmatpush.msra.mxu0 %v212
    %228 = vmatpush.msra.mxu0 %v211
    %229 = vmatpush.msra.mxu0 %v210
    %230 = vmatpush.msra.mxu0 %v209
    %231 = vmatmul.f32.gmra.mxu0 %v181
    %v232 = vpop.f32.mrf.mxu0
    %v233 = vadd.f32 %v214, %v232
    %234 = vmatmul.f32.gmra.mxu0 %v184
    %v235 = vpop.f32.mrf.mxu0
    %v236 = vadd.f32 %v214, %v235
    %237 = vdwg.mxu0
    %v238 = vld [vmem:[#allocation7 + $0x40] sm:$0xff]
    %v239 = vld [vmem:[#allocation7 + $0x48] sm:$0xff]
    %v240 = vld [vmem:[#allocation7 + $0x50] sm:$0xff]
    %v241 = vld [vmem:[#allocation7 + $0x58] sm:$0xff]
    %v242 = vld [vmem:[#allocation5 + $0x6] sm:$0x1]
    %v243 = vperm.slane %v242, 0
    %244 = vmatpush.msra.mxu0 0.0
    %245 = vmatpush.msra.mxu0 0.0
    %246 = vmatpush.msra.mxu0 0.0
    %247 = vmatpush.msra.mxu0 0.0
    %248 = vmatpush.msra.mxu0 0.0
    %249 = vmatpush.msra.mxu0 0.0
    %250 = vmatpush.msra.mxu0 0.0
    %251 = vmatpush.msra.mxu0 0.0
    %252 = vmatpush.msra.mxu0 0.0
    %253 = vmatpush.msra.mxu0 0.0
    %254 = vmatpush.msra.mxu0 0.0
    %255 = vmatpush.msra.mxu0 0.0
    %256 = vmatpush.msra.mxu0 %v241
    %257 = vmatpush.msra.mxu0 %v240
    %258 = vmatpush.msra.mxu0 %v239
    %259 = vmatpush.msra.mxu0 %v238
    %260 = vmatmul.f32.gmra.mxu0 %v181
    %v261 = vpop.f32.mrf.mxu0
    %v262 = vadd.f32 %v243, %v261
    %263 = vmatmul.f32.gmra.mxu0 %v184
    %v264 = vpop.f32.mrf.mxu0
    %v265 = vadd.f32 %v243, %v264
    %266 = vdwg.mxu0
    %v267 = vmax.f32 %v204, -60.0
    %v268 = vmax.f32 %v207, -60.0
    %v269 = vmin.f32 %v267, 30.0
    %v270 = vmin.f32 %v268, 30.0
    %v271 = vmul.f32 %v269, 1.442695
    %v272 = vpow.pop %v271
    %v273 = vmul.f32 %v270, 1.442695
    %v274 = vpow.pop %v273
    %v275 = vmul.f32 %v272, %v233
    %v276 = vmul.f32 %v274, %v236
    %v277 = vxor.u32 %v262, 2147483648
    %v278 = vxor.u32 %v265, 2147483648
    %v279 = vmul.f32 %v277, 1.442695
    %v280 = vpow.pop %v279
    %v281 = vmul.f32 %v278, 1.442695
    %v282 = vpow.pop %v281
    %v283 = vadd.f32 %v280, 1.0
    %v284 = vadd.f32 %v282, 1.0
    %v285 = vrcp.pop %v283
    %v286 = vmul.f32 %v283, %v285
    %v287 = vsub.f32 1.0, %v286
    %v288 = vmul.f32 %v285, %v287
    %v289 = vadd.f32 %v285, %v288
    %vm290 = vweird.f32 %v283
    %vm291 = vweird.f32 %v285
    %vm292 = vmor %vm290, %vm291
    %v293 = vsel %vm292, %v285, %v289
    %v294 = vand.u32 2147483647, %v283
    %vm295 = vcmp.eq.f32.partialorder %v294, 8.507059e+37
    %v296 = vand.u32 %v283, 2147483648
    %v297 = vor.u32 1.1754944e-38, %v296
    %v298 = vsel %vm295, %v297, %v293
    %v299 = vmul.f32 1.0, %v298
    %v300 = vrcp.pop %v284
    %v301 = vmul.f32 %v284, %v300
    %v302 = vsub.f32 1.0, %v301
    %v303 = vmul.f32 %v300, %v302
    %v304 = vadd.f32 %v300, %v303
    %vm305 = vweird.f32 %v284
    %vm306 = vweird.f32 %v300
    %vm307 = vmor %vm305, %vm306
    %v308 = vsel %vm307, %v300, %v304
    %v309 = vand.u32 2147483647, %v284
    %vm310 = vcmp.eq.f32.partialorder %v309, 8.507059e+37
    %v311 = vand.u32 %v284, 2147483648
    %v312 = vor.u32 1.1754944e-38, %v311
    %v313 = vsel %vm310, %v312, %v308
    %v314 = vmul.f32 1.0, %v313
    %vm315 = vcmask 64512
    %v317 = vsel %vm315, %v97, 0
    %319 = vmatpush.msra.mxu0 0.0
    %320 = vmatpush.msra.mxu0 0.0
    %321 = vmatpush.msra.mxu0 0.0
    %322 = vmatpush.msra.mxu0 0.0
    %323 = vmatpush.msra.mxu0 0.0
    %324 = vmatpush.msra.mxu0 0.0
    %325 = vmatpush.msra.mxu0 0.0
    %326 = vmatpush.msra.mxu0 0.0
    %327 = vmatpush.msra.mxu0 0.0
    %328 = vmatpush.msra.mxu0 0.0
    %329 = vmatpush.msra.mxu0 0.0
    %330 = vmatpush.msra.mxu0 0.0
    %331 = vmatpush.msra.mxu0 0.0
    %332 = vmatpush.msra.mxu0 0.0
    %333 = vmatpush.msra.mxu0 0.0
    %334 = vmatpush.msra.mxu0 %v272
    %335 = vmatmul.f32.gmra.mxu0 %v317
    %v336 = vpop.f32.mrf.mxu0
    %v337 = vadd.f32 0.0, %v336
    %338 = vdwg.mxu0
    %v340 = vsel %vm315, %v98, 0
    %342 = vmatpush.msra.mxu0 0.0
    %343 = vmatpush.msra.mxu0 0.0
    %344 = vmatpush.msra.mxu0 0.0
    %345 = vmatpush.msra.mxu0 0.0
    %346 = vmatpush.msra.mxu0 0.0
    %347 = vmatpush.msra.mxu0 0.0
    %348 = vmatpush.msra.mxu0 0.0
    %349 = vmatpush.msra.mxu0 0.0
    %350 = vmatpush.msra.mxu0 0.0
    %351 = vmatpush.msra.mxu0 0.0
    %352 = vmatpush.msra.mxu0 0.0
    %353 = vmatpush.msra.mxu0 0.0
    %354 = vmatpush.msra.mxu0 0.0
    %355 = vmatpush.msra.mxu0 0.0
    %356 = vmatpush.msra.mxu0 0.0
    %357 = vmatpush.msra.mxu0 %v275
    %358 = vmatmul.f32.gmra.mxu0 %v340
    %v359 = vpop.f32.mrf.mxu0
    %v360 = vadd.f32 0.0, %v359
    %361 = vdwg.mxu0
    %v362 = vmul.f32 %v78, %v360
    %v364 = vsel %vm315, %v99, 0
    %366 = vmatpush.msra.mxu0 0.0
    %367 = vmatpush.msra.mxu0 0.0
    %368 = vmatpush.msra.mxu0 0.0
    %369 = vmatpush.msra.mxu0 0.0
    %370 = vmatpush.msra.mxu0 0.0
    %371 = vmatpush.msra.mxu0 0.0
    %372 = vmatpush.msra.mxu0 0.0
    %373 = vmatpush.msra.mxu0 0.0
    %374 = vmatpush.msra.mxu0 0.0
    %375 = vmatpush.msra.mxu0 0.0
    %376 = vmatpush.msra.mxu0 0.0
    %377 = vmatpush.msra.mxu0 0.0
    %378 = vmatpush.msra.mxu0 0.0
    %379 = vmatpush.msra.mxu0 0.0
    %380 = vmatpush.msra.mxu0 0.0
    %381 = vmatpush.msra.mxu0 %v275
    %382 = vmatmul.f32.gmra.mxu0 %v364
    %v383 = vpop.f32.mrf.mxu0
    %v384 = vadd.f32 0.0, %v383
    %385 = vdwg.mxu0
    %v386 = vmul.f32 %v82, %v384
    %v387 = vadd.f32 %v362, %v386
    %v389 = vsel %vm315, %v100, 0
    %391 = vmatpush.msra.mxu0 0.0
    %392 = vmatpush.msra.mxu0 0.0
    %393 = vmatpush.msra.mxu0 0.0
    %394 = vmatpush.msra.mxu0 0.0
    %395 = vmatpush.msra.mxu0 0.0
    %396 = vmatpush.msra.mxu0 0.0
    %397 = vmatpush.msra.mxu0 0.0
    %398 = vmatpush.msra.mxu0 0.0
    %399 = vmatpush.msra.mxu0 0.0
    %400 = vmatpush.msra.mxu0 0.0
    %401 = vmatpush.msra.mxu0 0.0
    %402 = vmatpush.msra.mxu0 0.0
    %403 = vmatpush.msra.mxu0 0.0
    %404 = vmatpush.msra.mxu0 0.0
    %405 = vmatpush.msra.mxu0 0.0
    %406 = vmatpush.msra.mxu0 %v275
    %407 = vmatmul.f32.gmra.mxu0 %v389
    %v408 = vpop.f32.mrf.mxu0
    %v409 = vadd.f32 0.0, %v408
    %410 = vdwg.mxu0
    %v411 = vmul.f32 %v87, %v409
    %v412 = vadd.f32 %v387, %v411
    %v414 = vsel %vm315, %v101, 0
    %416 = vmatpush.msra.mxu0 0.0
    %417 = vmatpush.msra.mxu0 0.0
    %418 = vmatpush.msra.mxu0 0.0
    %419 = vmatpush.msra.mxu0 0.0
    %420 = vmatpush.msra.mxu0 0.0
    %421 = vmatpush.msra.mxu0 0.0
    %422 = vmatpush.msra.mxu0 0.0
    %423 = vmatpush.msra.mxu0 0.0
    %424 = vmatpush.msra.mxu0 0.0
    %425 = vmatpush.msra.mxu0 0.0
    %426 = vmatpush.msra.mxu0 0.0
    %427 = vmatpush.msra.mxu0 0.0
    %428 = vmatpush.msra.mxu0 0.0
    %429 = vmatpush.msra.mxu0 0.0
    %430 = vmatpush.msra.mxu0 0.0
    %431 = vmatpush.msra.mxu0 %v275
    %432 = vmatmul.f32.gmra.mxu0 %v414
    %v433 = vpop.f32.mrf.mxu0
    %v434 = vadd.f32 0.0, %v433
    %435 = vdwg.mxu0
    %v436 = vmul.f32 %v92, %v434
    %v437 = vadd.f32 %v412, %v436
    %v438 = vmul.f32 %v299, %v437
    %v439 = vrcp.pop %v337
    %v440 = vmul.f32 %v337, %v439
    %v441 = vsub.f32 1.0, %v440
    %v442 = vmul.f32 %v439, %v441
    %v443 = vadd.f32 %v439, %v442
    %vm444 = vweird.f32 %v337
    %vm445 = vweird.f32 %v439
    %vm446 = vmor %vm444, %vm445
    %v447 = vsel %vm446, %v439, %v443
    %v448 = vand.u32 2147483647, %v337
    %vm449 = vcmp.eq.f32.partialorder %v448, 8.507059e+37
    %v450 = vand.u32 %v337, 2147483648
    %v451 = vor.u32 1.1754944e-38, %v450
    %v452 = vsel %vm449, %v451, %v447
    %v453 = vmul.f32 %v438, %v452
    %454 = vmatpush.msra.mxu0 0.0
    %455 = vmatpush.msra.mxu0 0.0
    %456 = vmatpush.msra.mxu0 0.0
    %457 = vmatpush.msra.mxu0 0.0
    %458 = vmatpush.msra.mxu0 0.0
    %459 = vmatpush.msra.mxu0 0.0
    %460 = vmatpush.msra.mxu0 0.0
    %461 = vmatpush.msra.mxu0 0.0
    %462 = vmatpush.msra.mxu0 0.0
    %463 = vmatpush.msra.mxu0 0.0
    %464 = vmatpush.msra.mxu0 0.0
    %465 = vmatpush.msra.mxu0 0.0
    %466 = vmatpush.msra.mxu0 0.0
    %467 = vmatpush.msra.mxu0 0.0
    %468 = vmatpush.msra.mxu0 0.0
    %469 = vmatpush.msra.mxu0 %v274
    %470 = vmatmul.f32.gmra.mxu0 %v317
    %v471 = vpop.f32.mrf.mxu0
    %v472 = vadd.f32 0.0, %v471
    %473 = vdwg.mxu0
    %474 = vmatpush.msra.mxu0 0.0
    %475 = vmatpush.msra.mxu0 0.0
    %476 = vmatpush.msra.mxu0 0.0
    %477 = vmatpush.msra.mxu0 0.0
    %478 = vmatpush.msra.mxu0 0.0
    %479 = vmatpush.msra.mxu0 0.0
    %480 = vmatpush.msra.mxu0 0.0
    %481 = vmatpush.msra.mxu0 0.0
    %482 = vmatpush.msra.mxu0 0.0
    %483 = vmatpush.msra.mxu0 0.0
    %484 = vmatpush.msra.mxu0 0.0
    %485 = vmatpush.msra.mxu0 0.0
    %486 = vmatpush.msra.mxu0 0.0
    %487 = vmatpush.msra.mxu0 0.0
    %488 = vmatpush.msra.mxu0 0.0
    %489 = vmatpush.msra.mxu0 %v276
    %490 = vmatmul.f32.gmra.mxu0 %v340
    %v491 = vpop.f32.mrf.mxu0
    %v492 = vadd.f32 0.0, %v491
    %493 = vdwg.mxu0
    %v494 = vmul.f32 %v78, %v492
    %495 = vmatpush.msra.mxu0 0.0
    %496 = vmatpush.msra.mxu0 0.0
    %497 = vmatpush.msra.mxu0 0.0
    %498 = vmatpush.msra.mxu0 0.0
    %499 = vmatpush.msra.mxu0 0.0
    %500 = vmatpush.msra.mxu0 0.0
    %501 = vmatpush.msra.mxu0 0.0
    %502 = vmatpush.msra.mxu0 0.0
    %503 = vmatpush.msra.mxu0 0.0
    %504 = vmatpush.msra.mxu0 0.0
    %505 = vmatpush.msra.mxu0 0.0
    %506 = vmatpush.msra.mxu0 0.0
    %507 = vmatpush.msra.mxu0 0.0
    %508 = vmatpush.msra.mxu0 0.0
    %509 = vmatpush.msra.mxu0 0.0
    %510 = vmatpush.msra.mxu0 %v276
    %511 = vmatmul.f32.gmra.mxu0 %v364
    %v512 = vpop.f32.mrf.mxu0
    %v513 = vadd.f32 0.0, %v512
    %514 = vdwg.mxu0
    %v515 = vmul.f32 %v82, %v513
    %v516 = vadd.f32 %v494, %v515
    %517 = vmatpush.msra.mxu0 0.0
    %518 = vmatpush.msra.mxu0 0.0
    %519 = vmatpush.msra.mxu0 0.0
    %520 = vmatpush.msra.mxu0 0.0
    %521 = vmatpush.msra.mxu0 0.0
    %522 = vmatpush.msra.mxu0 0.0
    %523 = vmatpush.msra.mxu0 0.0
    %524 = vmatpush.msra.mxu0 0.0
    %525 = vmatpush.msra.mxu0 0.0
    %526 = vmatpush.msra.mxu0 0.0
    %527 = vmatpush.msra.mxu0 0.0
    %528 = vmatpush.msra.mxu0 0.0
    %529 = vmatpush.msra.mxu0 0.0
    %530 = vmatpush.msra.mxu0 0.0
    %531 = vmatpush.msra.mxu0 0.0
    %532 = vmatpush.msra.mxu0 %v276
    %533 = vmatmul.f32.gmra.mxu0 %v389
    %v534 = vpop.f32.mrf.mxu0
    %v535 = vadd.f32 0.0, %v534
    %536 = vdwg.mxu0
    %v537 = vmul.f32 %v87, %v535
    %v538 = vadd.f32 %v516, %v537
    %539 = vmatpush.msra.mxu0 0.0
    %540 = vmatpush.msra.mxu0 0.0
    %541 = vmatpush.msra.mxu0 0.0
    %542 = vmatpush.msra.mxu0 0.0
    %543 = vmatpush.msra.mxu0 0.0
    %544 = vmatpush.msra.mxu0 0.0
    %545 = vmatpush.msra.mxu0 0.0
    %546 = vmatpush.msra.mxu0 0.0
    %547 = vmatpush.msra.mxu0 0.0
    %548 = vmatpush.msra.mxu0 0.0
    %549 = vmatpush.msra.mxu0 0.0
    %550 = vmatpush.msra.mxu0 0.0
    %551 = vmatpush.msra.mxu0 0.0
    %552 = vmatpush.msra.mxu0 0.0
    %553 = vmatpush.msra.mxu0 0.0
    %554 = vmatpush.msra.mxu0 %v276
    %555 = vmatmul.f32.gmra.mxu0 %v414
    %v556 = vpop.f32.mrf.mxu0
    %v557 = vadd.f32 0.0, %v556
    %558 = vdwg.mxu0
    %v559 = vmul.f32 %v92, %v557
    %v560 = vadd.f32 %v538, %v559
    %v561 = vmul.f32 %v314, %v560
    %v562 = vrcp.pop %v472
    %v563 = vmul.f32 %v472, %v562
    %v564 = vsub.f32 1.0, %v563
    %v565 = vmul.f32 %v562, %v564
    %v566 = vadd.f32 %v562, %v565
    %vm567 = vweird.f32 %v472
    %vm568 = vweird.f32 %v562
    %vm569 = vmor %vm567, %vm568
    %v570 = vsel %vm569, %v562, %v566
    %v571 = vand.u32 2147483647, %v472
    %vm572 = vcmp.eq.f32.partialorder %v571, 8.507059e+37
    %v573 = vand.u32 %v472, 2147483648
    %v574 = vor.u32 1.1754944e-38, %v573
    %v575 = vsel %vm572, %v574, %v570
    %v576 = vmul.f32 %v561, %v575
    %v577 = vld [vmem:[#allocation7 + $0x60] sm:$0xff]
    %v578 = vld [vmem:[#allocation7 + $0x68] sm:$0xff]
    %v579 = vld [vmem:[#allocation7 + $0x70] sm:$0xff]
    %v580 = vld [vmem:[#allocation7 + $0x78] sm:$0xff]
    %v581 = vld [vmem:[#allocation5 + $0x7] sm:$0x1]
    %v582 = vperm.slane %v581, 0
    %v584 = vsel %vm103, %v453, 0
    %v587 = vsel %vm103, %v576, 0
    %589 = vmatpush.msra.mxu0 0.0
    %590 = vmatpush.msra.mxu0 0.0
    %591 = vmatpush.msra.mxu0 0.0
    %592 = vmatpush.msra.mxu0 0.0
    %593 = vmatpush.msra.mxu0 0.0
    %594 = vmatpush.msra.mxu0 0.0
    %595 = vmatpush.msra.mxu0 0.0
    %596 = vmatpush.msra.mxu0 0.0
    %597 = vmatpush.msra.mxu0 0.0
    %598 = vmatpush.msra.mxu0 0.0
    %599 = vmatpush.msra.mxu0 0.0
    %600 = vmatpush.msra.mxu0 0.0
    %601 = vmatpush.msra.mxu0 %v580
    %602 = vmatpush.msra.mxu0 %v579
    %603 = vmatpush.msra.mxu0 %v578
    %604 = vmatpush.msra.mxu0 %v577
    %605 = vmatmul.f32.gmra.mxu0 %v584
    %v606 = vpop.f32.mrf.mxu0
    %v607 = vadd.f32 %v582, %v606
    %608 = vmatmul.f32.gmra.mxu0 %v587
    %v609 = vpop.f32.mrf.mxu0
    %v610 = vadd.f32 %v582, %v609
    %611 = vdwg.mxu0
    %613 = vset.pattern.permute.xlu0 0
    %614 = vperm.xlu0 %613, %v102
    %v615 = vpop.permute.xlu0 %614
    %v617 = vmul.f32 %v607, %v615
    %v618 = vmul.f32 %v610, %v615
    %v619 = vadd.f32 %v62, %v617
    %v620 = vadd.f32 %v63, %v618
    %v621 = vsel %vm103, %v619, 0.0
    %622 = vadd.xlane.f32.xlu0 %v621
    %v623 = vpop.xlane.xlu0 %622
    %v624 = vsel %vm103, %v620, 0.0
    %625 = vadd.xlane.f32.xlu0 %v624
    %v626 = vpop.xlane.xlu0 %625
    %v627 = vmul.f32 %v623, %v116
    %v628 = vmul.f32 %v626, %v116
    %v629 = vsub.f32 %v619, %v627
    %v630 = vsub.f32 %v620, %v628
    %v631 = vmul.f32 %v629, %v629
    %v632 = vmul.f32 %v630, %v630
    %v633 = vsel %vm103, %v631, 0.0
    %634 = vadd.xlane.f32.xlu0 %v633
    %v635 = vpop.xlane.xlu0 %634
    %v636 = vsel %vm103, %v632, 0.0
    %637 = vadd.xlane.f32.xlu0 %v636
    %v638 = vpop.xlane.xlu0 %637
    %v639 = vmul.f32 %v635, %v116
    %v640 = vmul.f32 %v638, %v116
    %v641 = vadd.f32 %v639, 1e-05
    %v642 = vadd.f32 %v640, 1e-05
    %v643 = vrsqrt.pop %v641
    %v644 = vmul.f32 %v643, %v641
    %v645 = vmul.f32 %v644, %v643
    %v646 = vmul.f32 0.5, %v645
    %v647 = vsub.f32 1.5, %v646
    %v648 = vmul.f32 %v643, %v647
    %vm649 = vweird.f32 %v641
    %vm650 = vweird.f32 %v643
    %vm651 = vmor %vm649, %vm650
    %v652 = vsel %vm651, %v643, %v648
    %v653 = vrsqrt.pop %v642
    %v654 = vmul.f32 %v653, %v642
    %v655 = vmul.f32 %v654, %v653
    %v656 = vmul.f32 0.5, %v655
    %v657 = vsub.f32 1.5, %v656
    %v658 = vmul.f32 %v653, %v657
    %vm659 = vweird.f32 %v642
    %vm660 = vweird.f32 %v653
    %vm661 = vmor %vm659, %vm660
    %v662 = vsel %vm661, %v653, %v658
    %v663 = vmul.f32 %v629, %v652
    %v664 = vmul.f32 %v630, %v662
    %v665 = vperm.slane %v95, 0
    %v666 = vmul.f32 %v663, %v665
    %v667 = vmul.f32 %v664, %v665
    %v668 = vperm.slane %v96, 0
    %v669 = vadd.f32 %v666, %v668
    %v670 = vadd.f32 %v667, %v668
    %v671 = vrot.slane %v669, 7
    %v672 = vrot.slane %v670, 7
    %v673 = vsel %vm163, %v671, %v672
    %v674 = vsel %vm163, %v672, %v671
    %v675 = vsel %vm168, 0.0, %v674
    %v676 = vsel %vm169, 0.0, %v673
    %v677 = vsel %vm73, %v675, %v669
    %v678 = vsel %vm73, %v676, %v670
    %v679 = vld [vmem:[#allocation7 + $0x80] sm:$0xff]
    %v680 = vld [vmem:[#allocation7 + $0x88] sm:$0xff]
    %v681 = vld [vmem:[#allocation7 + $0x90] sm:$0xff]
    %v682 = vld [vmem:[#allocation7 + $0x98] sm:$0xff]
    %v683 = vld [vmem:[#allocation5 + $0x8] sm:$0x1]
    %v684 = vperm.slane %v683, 0
    %v686 = vsel %vm103, %v677, 0
    %v689 = vsel %vm103, %v678, 0
    %691 = vmatpush.msra.mxu0 0.0
    %692 = vmatpush.msra.mxu0 0.0
    %693 = vmatpush.msra.mxu0 0.0
    %694 = vmatpush.msra.mxu0 0.0
    %695 = vmatpush.msra.mxu0 0.0
    %696 = vmatpush.msra.mxu0 0.0
    %697 = vmatpush.msra.mxu0 0.0
    %698 = vmatpush.msra.mxu0 0.0
    %699 = vmatpush.msra.mxu0 0.0
    %700 = vmatpush.msra.mxu0 0.0
    %701 = vmatpush.msra.mxu0 0.0
    %702 = vmatpush.msra.mxu0 0.0
    %703 = vmatpush.msra.mxu0 %v682
    %704 = vmatpush.msra.mxu0 %v681
    %705 = vmatpush.msra.mxu0 %v680
    %706 = vmatpush.msra.mxu0 %v679
    %707 = vmatmul.f32.gmra.mxu0 %v686
    %v708 = vpop.f32.mrf.mxu0
    %v709 = vadd.f32 %v684, %v708
    %710 = vmatmul.f32.gmra.mxu0 %v689
    %v711 = vpop.f32.mrf.mxu0
    %v712 = vadd.f32 %v684, %v711
    %713 = vdwg.mxu0
    %v714 = vld [vmem:[#allocation7 + $0xa0] sm:$0xff]
    %v715 = vld [vmem:[#allocation7 + $0xa8] sm:$0xff]
    %v716 = vld [vmem:[#allocation7 + $0xb0] sm:$0xff]
    %v717 = vld [vmem:[#allocation7 + $0xb8] sm:$0xff]
    %v718 = vld [vmem:[#allocation5 + $0x9] sm:$0x1]
    %v719 = vperm.slane %v718, 0
    %720 = vmatpush.msra.mxu0 0.0
    %721 = vmatpush.msra.mxu0 0.0
    %722 = vmatpush.msra.mxu0 0.0
    %723 = vmatpush.msra.mxu0 0.0
    %724 = vmatpush.msra.mxu0 0.0
    %725 = vmatpush.msra.mxu0 0.0
    %726 = vmatpush.msra.mxu0 0.0
    %727 = vmatpush.msra.mxu0 0.0
    %728 = vmatpush.msra.mxu0 0.0
    %729 = vmatpush.msra.mxu0 0.0
    %730 = vmatpush.msra.mxu0 0.0
    %731 = vmatpush.msra.mxu0 0.0
    %732 = vmatpush.msra.mxu0 %v717
    %733 = vmatpush.msra.mxu0 %v716
    %734 = vmatpush.msra.mxu0 %v715
    %735 = vmatpush.msra.mxu0 %v714
    %736 = vmatmul.f32.gmra.mxu0 %v686
    %v737 = vpop.f32.mrf.mxu0
    %v738 = vadd.f32 %v719, %v737
    %739 = vmatmul.f32.gmra.mxu0 %v689
    %v740 = vpop.f32.mrf.mxu0
    %v741 = vadd.f32 %v719, %v740
    %742 = vdwg.mxu0
    %v743 = vmin.f32 %v709, 20.0
    %v744 = vmin.f32 %v712, 20.0
    %v745 = vmul.f32 %v743, 1.442695
    %v746 = vpow.pop %v745
    %v747 = vmul.f32 %v744, 1.442695
    %v748 = vpow.pop %v747
    %v749 = vadd.f32 %v746, 2.0
    %v750 = vadd.f32 %v748, 2.0
    %v751 = vmul.f32 %v746, %v749
    %v752 = vmul.f32 %v748, %v750
    %v753 = vmul.f32 %v709, %v751
    %v754 = vmul.f32 %v712, %v752
    %v755 = vadd.f32 %v751, 2.0
    %v756 = vadd.f32 %v752, 2.0
    %v757 = vrcp.pop %v755
    %v758 = vmul.f32 %v755, %v757
    %v759 = vsub.f32 1.0, %v758
    %v760 = vmul.f32 %v757, %v759
    %v761 = vadd.f32 %v757, %v760
    %vm762 = vweird.f32 %v755
    %vm763 = vweird.f32 %v757
    %vm764 = vmor %vm762, %vm763
    %v765 = vsel %vm764, %v757, %v761
    %v766 = vand.u32 2147483647, %v755
    %vm767 = vcmp.eq.f32.partialorder %v766, 8.507059e+37
    %v768 = vand.u32 %v755, 2147483648
    %v769 = vor.u32 1.1754944e-38, %v768
    %v770 = vsel %vm767, %v769, %v765
    %v771 = vrcp.pop %v756
    %v772 = vmul.f32 %v756, %v771
    %v773 = vsub.f32 1.0, %v772
    %v774 = vmul.f32 %v771, %v773
    %v775 = vadd.f32 %v771, %v774
    %vm776 = vweird.f32 %v756
    %vm777 = vweird.f32 %v771
    %vm778 = vmor %vm776, %vm777
    %v779 = vsel %vm778, %v771, %v775
    %v780 = vand.u32 2147483647, %v756
    %vm781 = vcmp.eq.f32.partialorder %v780, 8.507059e+37
    %v782 = vand.u32 %v756, 2147483648
    %v783 = vor.u32 1.1754944e-38, %v782
    %v784 = vsel %vm781, %v783, %v779
    %v785 = vmul.f32 %v753, %v770
    %v786 = vmul.f32 %v754, %v784
    %v787 = vmul.f32 %v785, %v738
    %v788 = vmul.f32 %v786, %v741
    %v789 = vld [vmem:[#allocation7 + $0xc0] sm:$0xff]
    %v790 = vld [vmem:[#allocation7 + $0xc8] sm:$0xff]
    %v791 = vld [vmem:[#allocation7 + $0xd0] sm:$0xff]
    %v792 = vld [vmem:[#allocation7 + $0xd8] sm:$0xff]
    %v793 = vld [vmem:[#allocation7 + $0xe0] sm:$0xff]
    %v794 = vld [vmem:[#allocation7 + $0xe8] sm:$0xff]
    %v795 = vld [vmem:[#allocation7 + $0xf0] sm:$0xff]
    %v796 = vld [vmem:[#allocation7 + $0xf8] sm:$0xff]
    %v797 = vld [vmem:[#allocation7 + $0x100] sm:$0xff]
    %v798 = vld [vmem:[#allocation7 + $0x108] sm:$0xff]
    %v799 = vld [vmem:[#allocation5 + $0xa] sm:$0x1]
    %v800 = vperm.slane %v799, 0
    %vm801 = vcmask 654336
    %v803 = vsel %vm801, %v787, 0
    %v806 = vsel %vm801, %v788, 0
    %808 = vmatpush.msra.mxu0 0.0
    %809 = vmatpush.msra.mxu0 0.0
    %810 = vmatpush.msra.mxu0 0.0
    %811 = vmatpush.msra.mxu0 0.0
    %812 = vmatpush.msra.mxu0 0.0
    %813 = vmatpush.msra.mxu0 0.0
    %814 = vmatpush.msra.mxu0 %v798
    %815 = vmatpush.msra.mxu0 %v797
    %816 = vmatpush.msra.mxu0 %v796
    %817 = vmatpush.msra.mxu0 %v795
    %818 = vmatpush.msra.mxu0 %v794
    %819 = vmatpush.msra.mxu0 %v793
    %820 = vmatpush.msra.mxu0 %v792
    %821 = vmatpush.msra.mxu0 %v791
    %822 = vmatpush.msra.mxu0 %v790
    %823 = vmatpush.msra.mxu0 %v789
    %824 = vmatmul.f32.gmra.mxu0 %v803
    %v825 = vpop.f32.mrf.mxu0
    %v826 = vadd.f32 %v800, %v825
    %827 = vmatmul.f32.gmra.mxu0 %v806
    %v828 = vpop.f32.mrf.mxu0
    %v829 = vadd.f32 %v800, %v828
    %830 = vdwg.mxu0
    %v831 = vld [vmem:[#allocation7 + $0x110] sm:$0xff]
    %v832 = vld [vmem:[#allocation7 + $0x118] sm:$0xff]
    %v833 = vld [vmem:[#allocation7 + $0x120] sm:$0xff]
    %v834 = vld [vmem:[#allocation7 + $0x128] sm:$0xff]
    %v835 = vld [vmem:[#allocation5 + $0xb] sm:$0x1]
    %v836 = vperm.slane %v835, 0
    %837 = vmatpush.msra.mxu0 0.0
    %838 = vmatpush.msra.mxu0 0.0
    %839 = vmatpush.msra.mxu0 0.0
    %840 = vmatpush.msra.mxu0 0.0
    %841 = vmatpush.msra.mxu0 0.0
    %842 = vmatpush.msra.mxu0 0.0
    %843 = vmatpush.msra.mxu0 0.0
    %844 = vmatpush.msra.mxu0 0.0
    %845 = vmatpush.msra.mxu0 0.0
    %846 = vmatpush.msra.mxu0 0.0
    %847 = vmatpush.msra.mxu0 0.0
    %848 = vmatpush.msra.mxu0 0.0
    %849 = vmatpush.msra.mxu0 %v834
    %850 = vmatpush.msra.mxu0 %v833
    %851 = vmatpush.msra.mxu0 %v832
    %852 = vmatpush.msra.mxu0 %v831
    %853 = vmatmul.f32.gmra.mxu0 %v686
    %v854 = vpop.f32.mrf.mxu0
    %v855 = vadd.f32 %v836, %v854
    %856 = vmatmul.f32.gmra.mxu0 %v689
    %v857 = vpop.f32.mrf.mxu0
    %v858 = vadd.f32 %v836, %v857
    %859 = vdwg.mxu0
    %v860 = vxor.u32 %v855, 2147483648
    %v861 = vxor.u32 %v858, 2147483648
    %v862 = vmul.f32 %v860, 1.442695
    %v863 = vpow.pop %v862
    %v864 = vmul.f32 %v861, 1.442695
    %v865 = vpow.pop %v864
    %v866 = vadd.f32 %v863, 1.0
    %v867 = vadd.f32 %v865, 1.0
    %v868 = vrcp.pop %v866
    %v869 = vmul.f32 %v866, %v868
    %v870 = vsub.f32 1.0, %v869
    %v871 = vmul.f32 %v868, %v870
    %v872 = vadd.f32 %v868, %v871
    %vm873 = vweird.f32 %v866
    %vm874 = vweird.f32 %v868
    %vm875 = vmor %vm873, %vm874
    %v876 = vsel %vm875, %v868, %v872
    %v877 = vand.u32 2147483647, %v866
    %vm878 = vcmp.eq.f32.partialorder %v877, 8.507059e+37
    %v879 = vand.u32 %v866, 2147483648
    %v880 = vor.u32 1.1754944e-38, %v879
    %v881 = vsel %vm878, %v880, %v876
    %v882 = vmul.f32 1.0, %v881
    %v883 = vrcp.pop %v867
    %v884 = vmul.f32 %v867, %v883
    %v885 = vsub.f32 1.0, %v884
    %v886 = vmul.f32 %v883, %v885
    %v887 = vadd.f32 %v883, %v886
    %vm888 = vweird.f32 %v867
    %vm889 = vweird.f32 %v883
    %vm890 = vmor %vm888, %vm889
    %v891 = vsel %vm890, %v883, %v887
    %v892 = vand.u32 2147483647, %v867
    %vm893 = vcmp.eq.f32.partialorder %v892, 8.507059e+37
    %v894 = vand.u32 %v867, 2147483648
    %v895 = vor.u32 1.1754944e-38, %v894
    %v896 = vsel %vm893, %v895, %v891
    %v897 = vmul.f32 1.0, %v896
    %v898 = vmul.f32 %v882, %v826
    %v899 = vmul.f32 %v897, %v829
    %v900 = vadd.f32 %v619, %v898
    %v901 = vadd.f32 %v620, %v899
    %902 = vst.msk [vmem:[#allocation8] sm:$0xff] %vm103, %v900
    %903 = vst.msk [vmem:[#allocation8 + $0x8] sm:$0xff] %vm103, %v901
    // Predicated region
    $region26: #{tpu_custom_call.1} parent=1 // pred_check
      _
    $region27: #{tpu_custom_call.1} parent=1 // pred_check_branch
      %905 = sbr.rel (0) target = $region29
    $region28: #{tpu_custom_call.1} parent=1 // pred_region
      %907 = vsyncadd [#allocation4], 0
      %s908 = sshll.u32 [#allocation8], 4
      %s909 = int_to_ptr.vmem [resolvable:$true] %s908
      %s910 = sshll.u32 %s3, 4
      %s911 = int_to_ptr.hbm [resolvable:$true] %s910
      %916 = dma.vmem_to_hbm [thread:$0]  %s909, 256, %s911, [#allocation4], 128, 128, 8
    $region29: #{tpu_custom_call.1} parent=1 // pred_fallthru
      _
    // Predicated region
    $region30: #{tpu_custom_call.1} parent=1 // pred_check
      _
    $region31: #{tpu_custom_call.1} parent=1 // pred_check_branch
      %918 = sbr.rel (0) target = $region33
    $region32: #{tpu_custom_call.1} parent=1 // pred_region
      %920 = dma.done [#allocation4], 256
    $region33: #{tpu_custom_call.1} parent=1 // pred_fallthru
      _
    %921 = vsyncpa [#allocation3], 1
    %922 = vsyncpa [#allocation6], 1
    %923 = vsyncpa [#allocation4], 1

</llo_original>
